<compile_context>
chip_gen: v7x
topology: tpu7x:2x2x1
jax: 0.10.0
libtpu: 0.0.40
codegen_flags: <defaults>
</compile_context>

<pallas_src>
import functools
import math

import jax
import jax.numpy as jnp
from jax import lax
from jax.experimental import pallas as pl
from jax.experimental.pallas import tpu as pltpu  # noqa: F401  (kept for TPU params if needed)


# ----------------------------------------------------------------------------
# Output-slab column layout (shared by kernel and wrapper)
# ----------------------------------------------------------------------------
def _out_layout(cfg):
    ed = cfg["embedding_dims"]
    L = cfg["latent_dim"]
    Din = cfg["input_dim"]
    cols = {}
    c = 0

    def put(name, w):
        nonlocal c
        cols[name] = (c, w)
        c += w

    put("recon", Din)
    for l, d in enumerate(ed):
        put(f"feat_{l}", d)
    for l, d in enumerate(ed):
        put(f"q_{l}", d)
    put("z", L)
    put("mu", L)
    put("logvar", L)
    width = ((c + 127) // 128) * 128
    return cols, width


# ----------------------------------------------------------------------------
# Fused forward kernel
# ----------------------------------------------------------------------------
def _fused_hqvae_kernel(params_ref, data_ref, out_ref, idx_ref, loss_ref, *,
                        cfg, layout, out_cols):
    ed = cfg["embedding_dims"]
    n_lvl = len(ed)
    n_enc = len(cfg["encoder_hidden_dims"])
    n_dec = len(cfg["decoder_hidden_dims"])
    commitment = cfg.get("commitment_costs", [0.25] * n_lvl)
    Din = cfg["input_dim"]
    L = cfg["latent_dim"]
    B = data_ref.shape[0]

    # ---- static-slice views into the packed parameter slab --------------------
    def get(name):
        r0, r, c = layout[name]
        return params_ref[r0:r0 + r, :c]

    def get_rows(name, a, b):
        r0, _, c = layout[name]
        return params_ref[r0 + a:r0 + b, :c]

    def put_out(name, arr):
        c0, w = out_cols[name]
        out_ref[:, c0:c0 + w] = arr

    def dense(h, wname, bname, relu=False):
        y = jnp.dot(h, get(wname), preferred_element_type=jnp.float32) + get(bname)
        return jnp.maximum(y, 0.0) if relu else y

    x = data_ref[:, 0:Din]
    eps = data_ref[:, Din:Din + L]

    # zero padding lanes of the output slab once (deterministic output)
    out_ref[...] = jnp.zeros(out_ref.shape, out_ref.dtype)

    # ---- HierarchicalEncoder (dropout == identity) ----------------------------
    h = x
    for i in range(n_enc):
        h = dense(h, f"enc_w{i}", f"enc_b{i}", relu=True)
    feats = []
    for l in range(n_lvl):
        f = dense(h, f"head_w{l}", f"head_b{l}")
        feats.append(f)
        put_out(f"feat_{l}", f)

    # ---- VariationalBayesLayer (per-level row slices of wmu/wlv, no concat) ---
    offs = []
    o = 0
    for d in ed:
        offs.append((o, o + d))
        o += d

    mu = get("bmu")
    lv = get("blv")
    for f, (a, b) in zip(feats, offs):
        mu = mu + jnp.dot(f, get_rows("wmu", a, b), preferred_element_type=jnp.float32)
        lv = lv + jnp.dot(f, get_rows("wlv", a, b), preferred_element_type=jnp.float32)
    std = jnp.exp(0.5 * lv)
    z = mu + eps * std
    put_out("z", z)
    put_out("mu", mu)
    put_out("logvar", lv)

    pmu = get("pmu")
    plv = get("plv")
    kl_terms = plv - lv + (jnp.exp(lv) + (mu - pmu) ** 2) * jnp.exp(-plv) - 1.0
    kl = 0.5 * jnp.sum(kl_terms, axis=1, keepdims=True)                 # [B, 1]
    kl_mean = jnp.sum(kl, axis=0, keepdims=True) / float(B)             # [1, 1]

    # ---- HierarchicalVQLayer (projection MLP + nearest codebook entry) --------
    lane_iota_b = lax.broadcasted_iota(jnp.int32, (B, 128), 1)
    idx_packed = jnp.zeros((B, 128), jnp.int32)
    quantized = []
    vq_per_level = []
    total_vq = jnp.zeros((1, 1), jnp.float32)
    for l in range(n_lvl):
        p = dense(dense(feats[l], f"proj_w1_{l}", f"proj_b1_{l}", relu=True),
                  f"proj_w2_{l}", f"proj_b2_{l}")
        cb = get(f"cb_{l}")
        K, D = cb.shape
        c2 = get(f"c2_{l}")                                             # (1, K), precomputed
        xc = jnp.dot(p, cb.T, preferred_element_type=jnp.float32)       # [B, K]
        # ||p||^2 is constant per row -> irrelevant for argmin; drop it.
        dist = c2 - 2.0 * xc                                            # [B, K]

        # argmin with first-index tie breaking (matches torch.argmin)
        min_val = jnp.min(dist, axis=1, keepdims=True)                  # [B, 1]
        kio = lax.broadcasted_iota(jnp.int32, (B, K), 1)
        idx = jnp.min(jnp.where(dist == min_val, kio, K), axis=1, keepdims=True)
        onehot = (kio == idx).astype(jnp.float32)
        q = jnp.dot(onehot, cb, preferred_element_type=jnp.float32)     # [B, D]
        quantized.append(q)
        put_out(f"q_{l}", q)

        # forward value of q_latent_loss + beta * e_latent_loss == (1+beta)*mse
        diff = q - p
        s = jnp.sum(jnp.sum(diff * diff, axis=1, keepdims=True), axis=0,
                    keepdims=True)
        vq_l = (1.0 + float(commitment[l])) * s / float(B * D)          # [1, 1]
        vq_per_level.append(vq_l)
        total_vq = total_vq + vq_l

        idx_packed = idx_packed + jnp.where(lane_iota_b == l, idx, 0)

    idx_ref[...] = idx_packed

    # ---- HierarchicalDecoder (first layer: per-level row slices of dec_w0) ----
    d = get("dec_b0")
    for q, (a, b) in zip(quantized, offs):
        d = d + jnp.dot(q, get_rows("dec_w0", a, b), preferred_element_type=jnp.float32)
    d = jnp.maximum(d, 0.0)
    for i in range(1, n_dec):
        d = dense(d, f"dec_w{i}", f"dec_b{i}", relu=True)
    recon = dense(d, "deco_w", "deco_b")
    put_out("recon", recon)

    # ---- Losses: fused reductions, one lane-dense (1, 128) row ----------------
    rd = recon - x
    rs = jnp.sum(jnp.sum(rd * rd, axis=1, keepdims=True), axis=0, keepdims=True)
    recon_loss = rs / float(B * Din)                                    # [1, 1]
    total = (cfg["recon_weight"] * recon_loss
             + cfg["vq_weight"] * total_vq
             + cfg["kl_weight"] * kl_mean)

    lio = lax.broadcasted_iota(jnp.int32, (1, 128), 1)
    loss_row = (jnp.where(lio == 0, total, 0.0)
                + jnp.where(lio == 1, recon_loss, 0.0)
                + jnp.where(lio == 2, total_vq, 0.0)
                + jnp.where(lio == 3, kl_mean, 0.0))
    for i, v in enumerate(vq_per_level):
        loss_row = loss_row + jnp.where(lio == (4 + i), v, 0.0)
    loss_ref[...] = loss_row


# ----------------------------------------------------------------------------
# Parameter init + host-side packing into a single lane-padded slab
# ----------------------------------------------------------------------------
def init_params(key, cfg):
    keys = iter(jax.random.split(key, 64))

    def lin(fan_in, fan_out):
        bound = 1.0 / math.sqrt(fan_in)
        w = jax.random.uniform(next(keys), (fan_in, fan_out), jnp.float32, -bound, bound)
        b = jax.random.uniform(next(keys), (fan_out,), jnp.float32, -bound, bound)
        return w, b

    params = {}
    dims = [cfg["input_dim"]] + cfg["encoder_hidden_dims"]
    params["enc_backbone"] = [lin(dims[i], dims[i + 1]) for i in range(len(dims) - 1)]
    cur = dims[-1]
    params["enc_heads"] = [lin(cur, d) for d in cfg["embedding_dims"]]

    tot_emb = sum(cfg["embedding_dims"])
    L = cfg["latent_dim"]
    wmu, bmu = lin(tot_emb, L)
    wlv, blv = lin(tot_emb, L)
    params["vb"] = dict(
        wmu=wmu, bmu=bmu, wlv=wlv, blv=blv,
        pmu=jnp.zeros((L,), jnp.float32), plv=jnp.zeros((L,), jnp.float32),
    )

    params["proj"] = []
    params["codebooks"] = []
    for K, D in zip(cfg["codebook_sizes"], cfg["embedding_dims"]):
        params["proj"].append((lin(D, D // 2), lin(D // 2, D)))
        params["codebooks"].append(
            jax.random.uniform(next(keys), (K, D), jnp.float32, -1.0 / K, 1.0 / K))

    ddims = [tot_emb] + cfg["decoder_hidden_dims"]
    params["dec_hidden"] = [lin(ddims[i], ddims[i + 1]) for i in range(len(ddims) - 1)]
    params["dec_out"] = lin(ddims[-1], cfg["input_dim"])
    return params


def pack_params(params, cfg):
    """Pack every parameter into one (rows, 128) f32 slab; each sub-array starts
    at a row offset that is a multiple of 8. Returns (slab, layout) where layout
    maps name -> (row_offset, rows, cols) as static Python ints."""
    LANES = 128
    blocks, layout = [], {}
    cur = [0]

    def add(name, arr):
        a = jnp.asarray(arr, jnp.float32)
        if a.ndim == 1:
            a = a.reshape(1, -1)
        r, c = a.shape
        # TODO(synk): support >128-lane parameter matrices via column tiling.
        assert c <= LANES, "parameter wider than 128 lanes not supported"
        rpad = ((r + 7) // 8) * 8
        blk = jnp.zeros((rpad, LANES), jnp.float32).at[:r, :c].set(a)
        blocks.append(blk)
        layout[name] = (cur[0], r, c)
        cur[0] += rpad

    for i, (w, b) in enumerate(params["enc_backbone"]):
        add(f"enc_w{i}", w)
        add(f"enc_b{i}", b)
    for l, (w, b) in enumerate(params["enc_heads"]):
        add(f"head_w{l}", w)
        add(f"head_b{l}", b)
    vb = params["vb"]
    add("wmu", vb["wmu"])
    add("bmu", vb["bmu"])
    add("wlv", vb["wlv"])
    add("blv", vb["blv"])
    add("pmu", vb["pmu"])
    add("plv", vb["plv"])
    for l, ((w1, b1), (w2, b2)) in enumerate(params["proj"]):
        add(f"proj_w1_{l}", w1)
        add(f"proj_b1_{l}", b1)
        add(f"proj_w2_{l}", w2)
        add(f"proj_b2_{l}", b2)
    for l, cb in enumerate(params["codebooks"]):
        add(f"cb_{l}", cb)
        add(f"c2_{l}", jnp.sum(cb * cb, axis=1))   # precomputed codebook norms
    for i, (w, b) in enumerate(params["dec_hidden"]):
        add(f"dec_w{i}", w)
        add(f"dec_b{i}", b)
    wo, bo = params["dec_out"]
    add("deco_w", wo)
    add("deco_b", bo)

    slab = jnp.concatenate(blocks, axis=0)
    return slab, layout


# ----------------------------------------------------------------------------
# Forward wrapper (single pallas_call, 2 inputs / 3 outputs)
# ----------------------------------------------------------------------------
def hqvae_forward(slab, x, eps, *, cfg, layout):
    assert len(cfg["encoder_hidden_dims"]) >= 1
    assert len(cfg["decoder_hidden_dims"]) >= 1
    ed = cfg["embedding_dims"]
    n_lvl = len(ed)
    B, Din = x.shape
    L = cfg["latent_dim"]

    out_cols, out_w = _out_layout(cfg)
    data_w = ((Din + L + 127) // 128) * 128
    data = jnp.zeros((B, data_w), jnp.float32)
    data = data.at[:, :Din].set(x.astype(jnp.float32))
    data = data.at[:, Din:Din + L].set(eps.astype(jnp.float32))

    out_shapes = (
        jax.ShapeDtypeStruct((B, out_w), jnp.float32),   # packed float outputs
        jax.ShapeDtypeStruct((B, 128), jnp.int32),       # lane-packed indices
        jax.ShapeDtypeStruct((1, 128), jnp.float32),     # lane-packed losses
    )

    out_slab, idx_packed, loss_vec = pl.pallas_call(
        functools.partial(_fused_hqvae_kernel, cfg=cfg, layout=layout,
                          out_cols=out_cols),
        out_shape=out_shapes,
    )(slab, data)

    def col(name):
        c0, w = out_cols[name]
        return out_slab[:, c0:c0 + w]

    return {
        "reconstruction": col("recon"),
        "hierarchical_features": [col(f"feat_{l}") for l in range(n_lvl)],
        "quantized_features": [col(f"q_{l}") for l in range(n_lvl)],
        "discrete_indices": [idx_packed[:, l] for l in range(n_lvl)],
        "latent_z": col("z"),
        "mu": col("mu"),
        "logvar": col("logvar"),
        "losses": {
            "total": loss_vec[0, 0],
            "reconstruction": loss_vec[0, 1],
            "vq": loss_vec[0, 2],
            "kl": loss_vec[0, 3],
        },
    }


# ----------------------------------------------------------------------------
# Main
# ----------------------------------------------------------------------------
if __name__ == "__main__":
    cfg = dict(
        input_dim=32,
        latent_dim=8,
        codebook_sizes=[32, 16],
        embedding_dims=[16, 8],
        encoder_hidden_dims=[64, 32],
        decoder_hidden_dims=[32, 64],
        recon_weight=1.0,
        vq_weight=1.0,
        kl_weight=0.1,
    )
    B = 2

    key = jax.random.PRNGKey(0)
    kp, kx, ke = jax.random.split(key, 3)
    params = init_params(kp, cfg)
    slab, layout = pack_params(params, cfg)   # one-time host-side packing

    x = jax.random.normal(kx, (B, cfg["input_dim"]), jnp.float32)
    # eps for the reparameterization trick (torch.randn_like), generated host-side.
    eps = jax.random.normal(ke, (B, cfg["latent_dim"]), jnp.float32)

    fwd = jax.jit(functools.partial(hqvae_forward, cfg=cfg, layout=layout))
    out = fwd(slab, x, eps)
    jax.block_until_ready(out)
    print("KERNEL_OK")
</pallas_src>

<mosaic_0001>
module attributes {stable_mosaic.version = 11 : i64} {
  func.func @_fused_hqvae_kernel(%arg0: memref<552x128xf32, #tpu.memory_space<vmem>>, %arg1: memref<2x128xf32, #tpu.memory_space<vmem>>, %arg2: memref<2x128xf32, #tpu.memory_space<vmem>>, %arg3: memref<2x128xi32, #tpu.memory_space<vmem>>, %arg4: memref<1x128xf32, #tpu.memory_space<vmem>>) attributes {dimension_semantics = [], scalar_prefetch = 0 : i64, scratch_operands = 0 : i64, tpu.core_type = #tpu.core_type<tc>} {
    %c0 = arith.constant 0 : index
    %c0_0 = arith.constant 0 : index
    %0 = vector.load %arg1[%c0, %c0_0] : memref<2x128xf32, #tpu.memory_space<vmem>>, vector<2x32xf32>
    %c0_1 = arith.constant 0 : index
    %c32 = arith.constant 32 : index
    %1 = vector.load %arg1[%c0_1, %c32] : memref<2x128xf32, #tpu.memory_space<vmem>>, vector<2x8xf32>
    %cst = arith.constant 0.000000e+00 : f32
    %2 = vector.broadcast %cst : f32 to vector<2x128xf32>
    %c0_2 = arith.constant 0 : index
    %c0_3 = arith.constant 0 : index
    %3 = vector.load %arg2[%c0_2, %c0_3] : memref<2x128xf32, #tpu.memory_space<vmem>>, vector<2x128xf32>
    tpu.vector_store %arg2[%c0_2, %c0_3], %2 {strides = array<i32>} : memref<2x128xf32, #tpu.memory_space<vmem>>, vector<2x128xf32>,
    %c0_4 = arith.constant 0 : index
    %c0_5 = arith.constant 0 : index
    %4 = vector.load %arg0[%c0_4, %c0_5] : memref<552x128xf32, #tpu.memory_space<vmem>>, vector<32x64xf32>
    %cst_6 = arith.constant dense<0.000000e+00> : vector<2x64xf32>
    %5 = tpu.matmul %0, %4, %cst_6 {dimension_numbers = #tpu.dot_dimension_numbers<[1], [0], [0], [1], [0, 0, 1, 1], [], []>} : vector<2x32xf32>, vector<32x64xf32>, vector<2x64xf32> -> vector<2x64xf32>
    %c32_7 = arith.constant 32 : index
    %c0_8 = arith.constant 0 : index
    %6 = vector.load %arg0[%c32_7, %c0_8] : memref<552x128xf32, #tpu.memory_space<vmem>>, vector<1x64xf32>
    %7 = vector.broadcast %6 : vector<1x64xf32> to vector<2x64xf32>
    %8 = arith.addf %5, %7 : vector<2x64xf32>
    %cst_9 = arith.constant 0.000000e+00 : f32
    %9 = vector.broadcast %cst_9 : f32 to vector<2x64xf32>
    %10 = arith.maximumf %8, %9 : vector<2x64xf32>
    %c40 = arith.constant 40 : index
    %c0_10 = arith.constant 0 : index
    %11 = vector.load %arg0[%c40, %c0_10] : memref<552x128xf32, #tpu.memory_space<vmem>>, vector<64x32xf32>
    %cst_11 = arith.constant dense<0.000000e+00> : vector<2x32xf32>
    %12 = tpu.matmul %10, %11, %cst_11 {dimension_numbers = #tpu.dot_dimension_numbers<[1], [0], [0], [1], [0, 0, 1, 1], [], []>} : vector<2x64xf32>, vector<64x32xf32>, vector<2x32xf32> -> vector<2x32xf32>
    %c104 = arith.constant 104 : index
    %c0_12 = arith.constant 0 : index
    %13 = vector.load %arg0[%c104, %c0_12] : memref<552x128xf32, #tpu.memory_space<vmem>>, vector<1x32xf32>
    %14 = vector.broadcast %13 : vector<1x32xf32> to vector<2x32xf32>
    %15 = arith.addf %12, %14 : vector<2x32xf32>
    %cst_13 = arith.constant 0.000000e+00 : f32
    %16 = vector.broadcast %cst_13 : f32 to vector<2x32xf32>
    %17 = arith.maximumf %15, %16 : vector<2x32xf32>
    %c112 = arith.constant 112 : index
    %c0_14 = arith.constant 0 : index
    %18 = vector.load %arg0[%c112, %c0_14] : memref<552x128xf32, #tpu.memory_space<vmem>>, vector<32x16xf32>
    %cst_15 = arith.constant dense<0.000000e+00> : vector<2x16xf32>
    %19 = tpu.matmul %17, %18, %cst_15 {dimension_numbers = #tpu.dot_dimension_numbers<[1], [0], [0], [1], [0, 0, 1, 1], [], []>} : vector<2x32xf32>, vector<32x16xf32>, vector<2x16xf32> -> vector<2x16xf32>
    %c144 = arith.constant 144 : index
    %c0_16 = arith.constant 0 : index
    %20 = vector.load %arg0[%c144, %c0_16] : memref<552x128xf32, #tpu.memory_space<vmem>>, vector<1x16xf32>
    %21 = vector.broadcast %20 : vector<1x16xf32> to vector<2x16xf32>
    %22 = arith.addf %19, %21 : vector<2x16xf32>
    %c0_17 = arith.constant 0 : index
    %c32_18 = arith.constant 32 : index
    %23 = vector.load %arg2[%c0_17, %c32_18] : memref<2x128xf32, #tpu.memory_space<vmem>>, vector<2x16xf32>
    tpu.vector_store %arg2[%c0_17, %c32_18], %22 {strides = array<i32>} : memref<2x128xf32, #tpu.memory_space<vmem>>, vector<2x16xf32>,
    %c152 = arith.constant 152 : index
    %c0_19 = arith.constant 0 : index
    %24 = vector.load %arg0[%c152, %c0_19] : memref<552x128xf32, #tpu.memory_space<vmem>>, vector<32x8xf32>
    %cst_20 = arith.constant dense<0.000000e+00> : vector<2x8xf32>
    %25 = tpu.matmul %17, %24, %cst_20 {dimension_numbers = #tpu.dot_dimension_numbers<[1], [0], [0], [1], [0, 0, 1, 1], [], []>} : vector<2x32xf32>, vector<32x8xf32>, vector<2x8xf32> -> vector<2x8xf32>
    %c184 = arith.constant 184 : index
    %c0_21 = arith.constant 0 : index
    %26 = vector.load %arg0[%c184, %c0_21] : memref<552x128xf32, #tpu.memory_space<vmem>>, vector<1x8xf32>
    %27 = vector.broadcast %26 : vector<1x8xf32> to vector<2x8xf32>
    %28 = arith.addf %25, %27 : vector<2x8xf32>
    %c0_22 = arith.constant 0 : index
    %c48 = arith.constant 48 : index
    %29 = vector.load %arg2[%c0_22, %c48] : memref<2x128xf32, #tpu.memory_space<vmem>>, vector<2x8xf32>
    tpu.vector_store %arg2[%c0_22, %c48], %28 {strides = array<i32>} : memref<2x128xf32, #tpu.memory_space<vmem>>, vector<2x8xf32>,
    %c216 = arith.constant 216 : index
    %c0_23 = arith.constant 0 : index
    %30 = vector.load %arg0[%c216, %c0_23] : memref<552x128xf32, #tpu.memory_space<vmem>>, vector<1x8xf32>
    %c248 = arith.constant 248 : index
    %c0_24 = arith.constant 0 : index
    %31 = vector.load %arg0[%c248, %c0_24] : memref<552x128xf32, #tpu.memory_space<vmem>>, vector<1x8xf32>
    %c192 = arith.constant 192 : index
    %c0_25 = arith.constant 0 : index
    %32 = vector.load %arg0[%c192, %c0_25] : memref<552x128xf32, #tpu.memory_space<vmem>>, vector<16x8xf32>
    %cst_26 = arith.constant dense<0.000000e+00> : vector<2x8xf32>
    %33 = tpu.matmul %22, %32, %cst_26 {dimension_numbers = #tpu.dot_dimension_numbers<[1], [0], [0], [1], [0, 0, 1, 1], [], []>} : vector<2x16xf32>, vector<16x8xf32>, vector<2x8xf32> -> vector<2x8xf32>
    %34 = vector.broadcast %30 : vector<1x8xf32> to vector<2x8xf32>
    %35 = arith.addf %34, %33 : vector<2x8xf32>
    %c224 = arith.constant 224 : index
    %c0_27 = arith.constant 0 : index
    %36 = vector.load %arg0[%c224, %c0_27] : memref<552x128xf32, #tpu.memory_space<vmem>>, vector<16x8xf32>
    %cst_28 = arith.constant dense<0.000000e+00> : vector<2x8xf32>
    %37 = tpu.matmul %22, %36, %cst_28 {dimension_numbers = #tpu.dot_dimension_numbers<[1], [0], [0], [1], [0, 0, 1, 1], [], []>} : vector<2x16xf32>, vector<16x8xf32>, vector<2x8xf32> -> vector<2x8xf32>
    %38 = vector.broadcast %31 : vector<1x8xf32> to vector<2x8xf32>
    %39 = arith.addf %38, %37 : vector<2x8xf32>
    %c208 = arith.constant 208 : index
    %c0_29 = arith.constant 0 : index
    %40 = vector.load %arg0[%c208, %c0_29] : memref<552x128xf32, #tpu.memory_space<vmem>>, vector<8x8xf32>
    %cst_30 = arith.constant dense<0.000000e+00> : vector<2x8xf32>
    %41 = tpu.matmul %28, %40, %cst_30 {dimension_numbers = #tpu.dot_dimension_numbers<[1], [0], [0], [1], [0, 0, 1, 1], [], []>} : vector<2x8xf32>, vector<8x8xf32>, vector<2x8xf32> -> vector<2x8xf32>
    %42 = arith.addf %35, %41 : vector<2x8xf32>
    %c240 = arith.constant 240 : index
    %c0_31 = arith.constant 0 : index
    %43 = vector.load %arg0[%c240, %c0_31] : memref<552x128xf32, #tpu.memory_space<vmem>>, vector<8x8xf32>
    %cst_32 = arith.constant dense<0.000000e+00> : vector<2x8xf32>
    %44 = tpu.matmul %28, %43, %cst_32 {dimension_numbers = #tpu.dot_dimension_numbers<[1], [0], [0], [1], [0, 0, 1, 1], [], []>} : vector<2x8xf32>, vector<8x8xf32>, vector<2x8xf32> -> vector<2x8xf32>
    %45 = arith.addf %39, %44 : vector<2x8xf32>
    %cst_33 = arith.constant 5.000000e-01 : f32
    %46 = vector.broadcast %cst_33 : f32 to vector<2x8xf32>
    %47 = arith.mulf %46, %45 : vector<2x8xf32>
    %48 = math.exp %47 : vector<2x8xf32>
    %49 = arith.mulf %1, %48 : vector<2x8xf32>
    %50 = arith.addf %42, %49 : vector<2x8xf32>
    %c0_34 = arith.constant 0 : index
    %c80 = arith.constant 80 : index
    %51 = vector.load %arg2[%c0_34, %c80] : memref<2x128xf32, #tpu.memory_space<vmem>>, vector<2x8xf32>
    tpu.vector_store %arg2[%c0_34, %c80], %50 {strides = array<i32>} : memref<2x128xf32, #tpu.memory_space<vmem>>, vector<2x8xf32>,
    %c0_35 = arith.constant 0 : index
    %c88 = arith.constant 88 : index
    %52 = vector.load %arg2[%c0_35, %c88] : memref<2x128xf32, #tpu.memory_space<vmem>>, vector<2x8xf32>
    tpu.vector_store %arg2[%c0_35, %c88], %42 {strides = array<i32>} : memref<2x128xf32, #tpu.memory_space<vmem>>, vector<2x8xf32>,
    %c0_36 = arith.constant 0 : index
    %c96 = arith.constant 96 : index
    %53 = vector.load %arg2[%c0_36, %c96] : memref<2x128xf32, #tpu.memory_space<vmem>>, vector<2x8xf32>
    tpu.vector_store %arg2[%c0_36, %c96], %45 {strides = array<i32>} : memref<2x128xf32, #tpu.memory_space<vmem>>, vector<2x8xf32>,
    %c256 = arith.constant 256 : index
    %c0_37 = arith.constant 0 : index
    %54 = vector.load %arg0[%c256, %c0_37] : memref<552x128xf32, #tpu.memory_space<vmem>>, vector<1x8xf32>
    %c264 = arith.constant 264 : index
    %c0_38 = arith.constant 0 : index
    %55 = vector.load %arg0[%c264, %c0_38] : memref<552x128xf32, #tpu.memory_space<vmem>>, vector<1x8xf32>
    %56 = vector.broadcast %55 : vector<1x8xf32> to vector<2x8xf32>
    %57 = arith.subf %56, %45 : vector<2x8xf32>
    %58 = math.exp %45 : vector<2x8xf32>
    %59 = vector.broadcast %54 : vector<1x8xf32> to vector<2x8xf32>
    %60 = arith.subf %42, %59 : vector<2x8xf32>
    %61 = arith.mulf %60, %60 : vector<2x8xf32>
    %62 = arith.addf %58, %61 : vector<2x8xf32>
    %cst_39 = arith.constant 0.000000e+00 : f32
    %63 = vector.broadcast %cst_39 : f32 to vector<1x8xf32>
    %64 = arith.subf %63, %55 : vector<1x8xf32>
    %65 = math.exp %64 : vector<1x8xf32>
    %66 = vector.broadcast %65 : vector<1x8xf32> to vector<2x8xf32>
    %67 = arith.mulf %62, %66 : vector<2x8xf32>
    %68 = arith.addf %57, %67 : vector<2x8xf32>
    %cst_40 = arith.constant 1.000000e+00 : f32
    %69 = vector.broadcast %cst_40 : f32 to vector<2x8xf32>
    %70 = arith.subf %68, %69 : vector<2x8xf32>
    %cst_41 = arith.constant dense<0.000000e+00> : vector<2xf32>
    %71 = vector.multi_reduction <add>, %70, %cst_41 [1] : vector<2x8xf32> to vector<2xf32>
    %72 = vector.shape_cast %71 : vector<2xf32> to vector<2x1xf32>
    %cst_42 = arith.constant 5.000000e-01 : f32
    %73 = vector.broadcast %cst_42 : f32 to vector<2x1xf32>
    %74 = arith.mulf %73, %72 : vector<2x1xf32>
    %cst_43 = arith.constant dense<0.000000e+00> : vector<1xf32>
    %75 = vector.multi_reduction <add>, %74, %cst_43 [0] : vector<2x1xf32> to vector<1xf32>
    %76 = vector.shape_cast %75 : vector<1xf32> to vector<1x1xf32>
    %cst_44 = arith.constant 2.000000e+00 : f32
    %77 = vector.broadcast %cst_44 : f32 to vector<1x1xf32>
    %78 = arith.divf %76, %77 : vector<1x1xf32>
    %79 = tpu.iota {dimensions = array<i32: 1>} : vector<2x128xi32>
    %c0_i32 = arith.constant 0 : i32
    %80 = vector.broadcast %c0_i32 : i32 to vector<2x128xi32>
    %cst_45 = arith.constant 0.000000e+00 : f32
    %81 = vector.broadcast %cst_45 : f32 to vector<1x1xf32>
    %c272 = arith.constant 272 : index
    %c0_46 = arith.constant 0 : index
    %82 = vector.load %arg0[%c272, %c0_46] : memref<552x128xf32, #tpu.memory_space<vmem>>, vector<16x8xf32>
    %cst_47 = arith.constant dense<0.000000e+00> : vector<2x8xf32>
    %83 = tpu.matmul %22, %82, %cst_47 {dimension_numbers = #tpu.dot_dimension_numbers<[1], [0], [0], [1], [0, 0, 1, 1], [], []>} : vector<2x16xf32>, vector<16x8xf32>, vector<2x8xf32> -> vector<2x8xf32>
    %c288 = arith.constant 288 : index
    %c0_48 = arith.constant 0 : index
    %84 = vector.load %arg0[%c288, %c0_48] : memref<552x128xf32, #tpu.memory_space<vmem>>, vector<1x8xf32>
    %85 = vector.broadcast %84 : vector<1x8xf32> to vector<2x8xf32>
    %86 = arith.addf %83, %85 : vector<2x8xf32>
    %cst_49 = arith.constant 0.000000e+00 : f32
    %87 = vector.broadcast %cst_49 : f32 to vector<2x8xf32>
    %88 = arith.maximumf %86, %87 : vector<2x8xf32>
    %c296 = arith.constant 296 : index
    %c0_50 = arith.constant 0 : index
    %89 = vector.load %arg0[%c296, %c0_50] : memref<552x128xf32, #tpu.memory_space<vmem>>, vector<8x16xf32>
    %cst_51 = arith.constant dense<0.000000e+00> : vector<2x16xf32>
    %90 = tpu.matmul %88, %89, %cst_51 {dimension_numbers = #tpu.dot_dimension_numbers<[1], [0], [0], [1], [0, 0, 1, 1], [], []>} : vector<2x8xf32>, vector<8x16xf32>, vector<2x16xf32> -> vector<2x16xf32>
    %c304 = arith.constant 304 : index
    %c0_52 = arith.constant 0 : index
    %91 = vector.load %arg0[%c304, %c0_52] : memref<552x128xf32, #tpu.memory_space<vmem>>, vector<1x16xf32>
    %92 = vector.broadcast %91 : vector<1x16xf32> to vector<2x16xf32>
    %93 = arith.addf %90, %92 : vector<2x16xf32>
    %c344 = arith.constant 344 : index
    %c0_53 = arith.constant 0 : index
    %94 = vector.load %arg0[%c344, %c0_53] : memref<552x128xf32, #tpu.memory_space<vmem>>, vector<32x16xf32>
    %c376 = arith.constant 376 : index
    %c0_54 = arith.constant 0 : index
    %95 = vector.load %arg0[%c376, %c0_54] : memref<552x128xf32, #tpu.memory_space<vmem>>, vector<1x32xf32>
    %96 = tpu.transpose %94, [1, 0] : vector<32x16xf32> -> vector<16x32xf32>
    %cst_55 = arith.constant dense<0.000000e+00> : vector<2x32xf32>
    %97 = tpu.matmul %93, %96, %cst_55 {dimension_numbers = #tpu.dot_dimension_numbers<[1], [0], [0], [1], [0, 0, 1, 1], [], []>} : vector<2x16xf32>, vector<16x32xf32>, vector<2x32xf32> -> vector<2x32xf32>
    %cst_56 = arith.constant 2.000000e+00 : f32
    %98 = vector.broadcast %cst_56 : f32 to vector<2x32xf32>
    %99 = arith.mulf %98, %97 : vector<2x32xf32>
    %100 = vector.broadcast %95 : vector<1x32xf32> to vector<2x32xf32>
    %101 = arith.subf %100, %99 : vector<2x32xf32>
    %cst_57 = arith.constant dense<0x7F800000> : vector<2xf32>
    %102 = vector.multi_reduction <minimumf>, %101, %cst_57 [1] : vector<2x32xf32> to vector<2xf32>
    %103 = vector.shape_cast %102 : vector<2xf32> to vector<2x1xf32>
    %104 = tpu.iota {dimensions = array<i32: 1>} : vector<2x32xi32>
    %105 = vector.broadcast %103 : vector<2x1xf32> to vector<2x32xf32>
    %106 = arith.cmpf oeq, %101, %105 : vector<2x32xf32>
    %c32_i32 = arith.constant 32 : i32
    %107 = vector.broadcast %c32_i32 : i32 to vector<2x32xi32>
    %108 = arith.select %106, %104, %107 : vector<2x32xi1>, vector<2x32xi32>
    %cst_58 = arith.constant dense<2147483647> : vector<2xi32>
    %109 = vector.multi_reduction <minsi>, %108, %cst_58 [1] : vector<2x32xi32> to vector<2xi32>
    %110 = vector.shape_cast %109 : vector<2xi32> to vector<2x1xi32>
    %111 = vector.broadcast %110 : vector<2x1xi32> to vector<2x32xi32>
    %112 = arith.cmpi eq, %104, %111 : vector<2x32xi32>
    %113 = arith.extui %112 : vector<2x32xi1> to vector<2x32xi32>
    %114 = arith.sitofp %113 : vector<2x32xi32> to vector<2x32xf32>
    %cst_59 = arith.constant dense<0.000000e+00> : vector<2x16xf32>
    %115 = tpu.matmul %114, %94, %cst_59 {dimension_numbers = #tpu.dot_dimension_numbers<[1], [0], [0], [1], [0, 0, 1, 1], [], []>} : vector<2x32xf32>, vector<32x16xf32>, vector<2x16xf32> -> vector<2x16xf32>
    %c0_60 = arith.constant 0 : index
    %c56 = arith.constant 56 : index
    %116 = vector.load %arg2[%c0_60, %c56] : memref<2x128xf32, #tpu.memory_space<vmem>>, vector<2x16xf32>
    tpu.vector_store %arg2[%c0_60, %c56], %115 {strides = array<i32>} : memref<2x128xf32, #tpu.memory_space<vmem>>, vector<2x16xf32>,
    %117 = arith.subf %115, %93 : vector<2x16xf32>
    %118 = arith.mulf %117, %117 : vector<2x16xf32>
    %cst_61 = arith.constant dense<0.000000e+00> : vector<2xf32>
    %119 = vector.multi_reduction <add>, %118, %cst_61 [1] : vector<2x16xf32> to vector<2xf32>
    %120 = vector.shape_cast %119 : vector<2xf32> to vector<2x1xf32>
    %cst_62 = arith.constant dense<0.000000e+00> : vector<1xf32>
    %121 = vector.multi_reduction <add>, %120, %cst_62 [0] : vector<2x1xf32> to vector<1xf32>
    %122 = vector.shape_cast %121 : vector<1xf32> to vector<1x1xf32>
    %cst_63 = arith.constant 1.250000e+00 : f32
    %123 = vector.broadcast %cst_63 : f32 to vector<1x1xf32>
    %124 = arith.mulf %123, %122 : vector<1x1xf32>
    %cst_64 = arith.constant 3.200000e+01 : f32
    %125 = vector.broadcast %cst_64 : f32 to vector<1x1xf32>
    %126 = arith.divf %124, %125 : vector<1x1xf32>
    %127 = arith.addf %81, %126 : vector<1x1xf32>
    %c0_i32_65 = arith.constant 0 : i32
    %128 = vector.broadcast %c0_i32_65 : i32 to vector<2x128xi32>
    %129 = arith.cmpi eq, %79, %128 : vector<2x128xi32>
    %c0_i32_66 = arith.constant 0 : i32
    %130 = vector.shape_cast %110 : vector<2x1xi32> to vector<2x1xi32>
    %131 = vector.broadcast %130 : vector<2x1xi32> to vector<2x128xi32>
    %132 = vector.broadcast %c0_i32_66 : i32 to vector<2x128xi32>
    %133 = arith.select %129, %131, %132 : vector<2x128xi1>, vector<2x128xi32>
    %134 = arith.addi %80, %133 : vector<2x128xi32>
    %c312 = arith.constant 312 : index
    %c0_67 = arith.constant 0 : index
    %135 = vector.load %arg0[%c312, %c0_67] : memref<552x128xf32, #tpu.memory_space<vmem>>, vector<8x4xf32>
    %cst_68 = arith.constant dense<0.000000e+00> : vector<2x4xf32>
    %136 = tpu.matmul %28, %135, %cst_68 {dimension_numbers = #tpu.dot_dimension_numbers<[1], [0], [0], [1], [0, 0, 1, 1], [], []>} : vector<2x8xf32>, vector<8x4xf32>, vector<2x4xf32> -> vector<2x4xf32>
    %c320 = arith.constant 320 : index
    %c0_69 = arith.constant 0 : index
    %137 = vector.load %arg0[%c320, %c0_69] : memref<552x128xf32, #tpu.memory_space<vmem>>, vector<1x4xf32>
    %138 = vector.broadcast %137 : vector<1x4xf32> to vector<2x4xf32>
    %139 = arith.addf %136, %138 : vector<2x4xf32>
    %cst_70 = arith.constant 0.000000e+00 : f32
    %140 = vector.broadcast %cst_70 : f32 to vector<2x4xf32>
    %141 = arith.maximumf %139, %140 : vector<2x4xf32>
    %c328 = arith.constant 328 : index
    %c0_71 = arith.constant 0 : index
    %142 = vector.load %arg0[%c328, %c0_71] : memref<552x128xf32, #tpu.memory_space<vmem>>, vector<4x8xf32>
    %cst_72 = arith.constant dense<0.000000e+00> : vector<2x8xf32>
    %143 = tpu.matmul %141, %142, %cst_72 {dimension_numbers = #tpu.dot_dimension_numbers<[1], [0], [0], [1], [0, 0, 1, 1], [], []>} : vector<2x4xf32>, vector<4x8xf32>, vector<2x8xf32> -> vector<2x8xf32>
    %c336 = arith.constant 336 : index
    %c0_73 = arith.constant 0 : index
    %144 = vector.load %arg0[%c336, %c0_73] : memref<552x128xf32, #tpu.memory_space<vmem>>, vector<1x8xf32>
    %145 = vector.broadcast %144 : vector<1x8xf32> to vector<2x8xf32>
    %146 = arith.addf %143, %145 : vector<2x8xf32>
    %c384 = arith.constant 384 : index
    %c0_74 = arith.constant 0 : index
    %147 = vector.load %arg0[%c384, %c0_74] : memref<552x128xf32, #tpu.memory_space<vmem>>, vector<16x8xf32>
    %c400 = arith.constant 400 : index
    %c0_75 = arith.constant 0 : index
    %148 = vector.load %arg0[%c400, %c0_75] : memref<552x128xf32, #tpu.memory_space<vmem>>, vector<1x16xf32>
    %149 = tpu.transpose %147, [1, 0] : vector<16x8xf32> -> vector<8x16xf32>
    %cst_76 = arith.constant dense<0.000000e+00> : vector<2x16xf32>
    %150 = tpu.matmul %146, %149, %cst_76 {dimension_numbers = #tpu.dot_dimension_numbers<[1], [0], [0], [1], [0, 0, 1, 1], [], []>} : vector<2x8xf32>, vector<8x16xf32>, vector<2x16xf32> -> vector<2x16xf32>
    %cst_77 = arith.constant 2.000000e+00 : f32
    %151 = vector.broadcast %cst_77 : f32 to vector<2x16xf32>
    %152 = arith.mulf %151, %150 : vector<2x16xf32>
    %153 = vector.broadcast %148 : vector<1x16xf32> to vector<2x16xf32>
    %154 = arith.subf %153, %152 : vector<2x16xf32>
    %cst_78 = arith.constant dense<0x7F800000> : vector<2xf32>
    %155 = vector.multi_reduction <minimumf>, %154, %cst_78 [1] : vector<2x16xf32> to vector<2xf32>
    %156 = vector.shape_cast %155 : vector<2xf32> to vector<2x1xf32>
    %157 = tpu.iota {dimensions = array<i32: 1>} : vector<2x16xi32>
    %158 = vector.broadcast %156 : vector<2x1xf32> to vector<2x16xf32>
    %159 = arith.cmpf oeq, %154, %158 : vector<2x16xf32>
    %c16_i32 = arith.constant 16 : i32
    %160 = vector.broadcast %c16_i32 : i32 to vector<2x16xi32>
    %161 = arith.select %159, %157, %160 : vector<2x16xi1>, vector<2x16xi32>
    %cst_79 = arith.constant dense<2147483647> : vector<2xi32>
    %162 = vector.multi_reduction <minsi>, %161, %cst_79 [1] : vector<2x16xi32> to vector<2xi32>
    %163 = vector.shape_cast %162 : vector<2xi32> to vector<2x1xi32>
    %164 = vector.broadcast %163 : vector<2x1xi32> to vector<2x16xi32>
    %165 = arith.cmpi eq, %157, %164 : vector<2x16xi32>
    %166 = arith.extui %165 : vector<2x16xi1> to vector<2x16xi32>
    %167 = arith.sitofp %166 : vector<2x16xi32> to vector<2x16xf32>
    %cst_80 = arith.constant dense<0.000000e+00> : vector<2x8xf32>
    %168 = tpu.matmul %167, %147, %cst_80 {dimension_numbers = #tpu.dot_dimension_numbers<[1], [0], [0], [1], [0, 0, 1, 1], [], []>} : vector<2x16xf32>, vector<16x8xf32>, vector<2x8xf32> -> vector<2x8xf32>
    %c0_81 = arith.constant 0 : index
    %c72 = arith.constant 72 : index
    %169 = vector.load %arg2[%c0_81, %c72] : memref<2x128xf32, #tpu.memory_space<vmem>>, vector<2x8xf32>
    tpu.vector_store %arg2[%c0_81, %c72], %168 {strides = array<i32>} : memref<2x128xf32, #tpu.memory_space<vmem>>, vector<2x8xf32>,
    %170 = arith.subf %168, %146 : vector<2x8xf32>
    %171 = arith.mulf %170, %170 : vector<2x8xf32>
    %cst_82 = arith.constant dense<0.000000e+00> : vector<2xf32>
    %172 = vector.multi_reduction <add>, %171, %cst_82 [1] : vector<2x8xf32> to vector<2xf32>
    %173 = vector.shape_cast %172 : vector<2xf32> to vector<2x1xf32>
    %cst_83 = arith.constant dense<0.000000e+00> : vector<1xf32>
    %174 = vector.multi_reduction <add>, %173, %cst_83 [0] : vector<2x1xf32> to vector<1xf32>
    %175 = vector.shape_cast %174 : vector<1xf32> to vector<1x1xf32>
    %cst_84 = arith.constant 1.250000e+00 : f32
    %176 = vector.broadcast %cst_84 : f32 to vector<1x1xf32>
    %177 = arith.mulf %176, %175 : vector<1x1xf32>
    %cst_85 = arith.constant 1.600000e+01 : f32
    %178 = vector.broadcast %cst_85 : f32 to vector<1x1xf32>
    %179 = arith.divf %177, %178 : vector<1x1xf32>
    %180 = arith.addf %127, %179 : vector<1x1xf32>
    %c1_i32 = arith.constant 1 : i32
    %181 = vector.broadcast %c1_i32 : i32 to vector<2x128xi32>
    %182 = arith.cmpi eq, %79, %181 : vector<2x128xi32>
    %c0_i32_86 = arith.constant 0 : i32
    %183 = vector.shape_cast %163 : vector<2x1xi32> to vector<2x1xi32>
    %184 = vector.broadcast %183 : vector<2x1xi32> to vector<2x128xi32>
    %185 = vector.broadcast %c0_i32_86 : i32 to vector<2x128xi32>
    %186 = arith.select %182, %184, %185 : vector<2x128xi1>, vector<2x128xi32>
    %187 = arith.addi %134, %186 : vector<2x128xi32>
    %c0_87 = arith.constant 0 : index
    %c0_88 = arith.constant 0 : index
    %188 = vector.load %arg3[%c0_87, %c0_88] : memref<2x128xi32, #tpu.memory_space<vmem>>, vector<2x128xi32>
    tpu.vector_store %arg3[%c0_87, %c0_88], %187 {strides = array<i32>} : memref<2x128xi32, #tpu.memory_space<vmem>>, vector<2x128xi32>,
    %c432 = arith.constant 432 : index
    %c0_89 = arith.constant 0 : index
    %189 = vector.load %arg0[%c432, %c0_89] : memref<552x128xf32, #tpu.memory_space<vmem>>, vector<1x32xf32>
    %c408 = arith.constant 408 : index
    %c0_90 = arith.constant 0 : index
    %190 = vector.load %arg0[%c408, %c0_90] : memref<552x128xf32, #tpu.memory_space<vmem>>, vector<16x32xf32>
    %cst_91 = arith.constant dense<0.000000e+00> : vector<2x32xf32>
    %191 = tpu.matmul %115, %190, %cst_91 {dimension_numbers = #tpu.dot_dimension_numbers<[1], [0], [0], [1], [0, 0, 1, 1], [], []>} : vector<2x16xf32>, vector<16x32xf32>, vector<2x32xf32> -> vector<2x32xf32>
    %192 = vector.broadcast %189 : vector<1x32xf32> to vector<2x32xf32>
    %193 = arith.addf %192, %191 : vector<2x32xf32>
    %c424 = arith.constant 424 : index
    %c0_92 = arith.constant 0 : index
    %194 = vector.load %arg0[%c424, %c0_92] : memref<552x128xf32, #tpu.memory_space<vmem>>, vector<8x32xf32>
    %cst_93 = arith.constant dense<0.000000e+00> : vector<2x32xf32>
    %195 = tpu.matmul %168, %194, %cst_93 {dimension_numbers = #tpu.dot_dimension_numbers<[1], [0], [0], [1], [0, 0, 1, 1], [], []>} : vector<2x8xf32>, vector<8x32xf32>, vector<2x32xf32> -> vector<2x32xf32>
    %196 = arith.addf %193, %195 : vector<2x32xf32>
    %cst_94 = arith.constant 0.000000e+00 : f32
    %197 = vector.broadcast %cst_94 : f32 to vector<2x32xf32>
    %198 = arith.maximumf %196, %197 : vector<2x32xf32>
    %c440 = arith.constant 440 : index
    %c0_95 = arith.constant 0 : index
    %199 = vector.load %arg0[%c440, %c0_95] : memref<552x128xf32, #tpu.memory_space<vmem>>, vector<32x64xf32>
    %cst_96 = arith.constant dense<0.000000e+00> : vector<2x64xf32>
    %200 = tpu.matmul %198, %199, %cst_96 {dimension_numbers = #tpu.dot_dimension_numbers<[1], [0], [0], [1], [0, 0, 1, 1], [], []>} : vector<2x32xf32>, vector<32x64xf32>, vector<2x64xf32> -> vector<2x64xf32>
    %c472 = arith.constant 472 : index
    %c0_97 = arith.constant 0 : index
    %201 = vector.load %arg0[%c472, %c0_97] : memref<552x128xf32, #tpu.memory_space<vmem>>, vector<1x64xf32>
    %202 = vector.broadcast %201 : vector<1x64xf32> to vector<2x64xf32>
    %203 = arith.addf %200, %202 : vector<2x64xf32>
    %cst_98 = arith.constant 0.000000e+00 : f32
    %204 = vector.broadcast %cst_98 : f32 to vector<2x64xf32>
    %205 = arith.maximumf %203, %204 : vector<2x64xf32>
    %c480 = arith.constant 480 : index
    %c0_99 = arith.constant 0 : index
    %206 = vector.load %arg0[%c480, %c0_99] : memref<552x128xf32, #tpu.memory_space<vmem>>, vector<64x32xf32>
    %cst_100 = arith.constant dense<0.000000e+00> : vector<2x32xf32>
    %207 = tpu.matmul %205, %206, %cst_100 {dimension_numbers = #tpu.dot_dimension_numbers<[1], [0], [0], [1], [0, 0, 1, 1], [], []>} : vector<2x64xf32>, vector<64x32xf32>, vector<2x32xf32> -> vector<2x32xf32>
    %c544 = arith.constant 544 : index
    %c0_101 = arith.constant 0 : index
    %208 = vector.load %arg0[%c544, %c0_101] : memref<552x128xf32, #tpu.memory_space<vmem>>, vector<1x32xf32>
    %209 = vector.broadcast %208 : vector<1x32xf32> to vector<2x32xf32>
    %210 = arith.addf %207, %209 : vector<2x32xf32>
    %c0_102 = arith.constant 0 : index
    %c0_103 = arith.constant 0 : index
    %211 = vector.load %arg2[%c0_102, %c0_103] : memref<2x128xf32, #tpu.memory_space<vmem>>, vector<2x32xf32>
    tpu.vector_store %arg2[%c0_102, %c0_103], %210 {strides = array<i32>} : memref<2x128xf32, #tpu.memory_space<vmem>>, vector<2x32xf32>,
    %212 = arith.subf %210, %0 : vector<2x32xf32>
    %213 = arith.mulf %212, %212 : vector<2x32xf32>
    %cst_104 = arith.constant dense<0.000000e+00> : vector<2xf32>
    %214 = vector.multi_reduction <add>, %213, %cst_104 [1] : vector<2x32xf32> to vector<2xf32>
    %215 = vector.shape_cast %214 : vector<2xf32> to vector<2x1xf32>
    %cst_105 = arith.constant dense<0.000000e+00> : vector<1xf32>
    %216 = vector.multi_reduction <add>, %215, %cst_105 [0] : vector<2x1xf32> to vector<1xf32>
    %217 = vector.shape_cast %216 : vector<1xf32> to vector<1x1xf32>
    %cst_106 = arith.constant 6.400000e+01 : f32
    %218 = vector.broadcast %cst_106 : f32 to vector<1x1xf32>
    %219 = arith.divf %217, %218 : vector<1x1xf32>
    %cst_107 = arith.constant 1.000000e+00 : f32
    %220 = vector.broadcast %cst_107 : f32 to vector<1x1xf32>
    %221 = arith.mulf %220, %219 : vector<1x1xf32>
    %cst_108 = arith.constant 1.000000e+00 : f32
    %222 = vector.broadcast %cst_108 : f32 to vector<1x1xf32>
    %223 = arith.mulf %222, %180 : vector<1x1xf32>
    %224 = arith.addf %221, %223 : vector<1x1xf32>
    %cst_109 = arith.constant 1.000000e-01 : f32
    %225 = vector.broadcast %cst_109 : f32 to vector<1x1xf32>
    %226 = arith.mulf %225, %78 : vector<1x1xf32>
    %227 = arith.addf %224, %226 : vector<1x1xf32>
    %228 = tpu.iota {dimensions = array<i32: 1>} : vector<1x128xi32>
    %c0_i32_110 = arith.constant 0 : i32
    %229 = vector.broadcast %c0_i32_110 : i32 to vector<1x128xi32>
    %230 = arith.cmpi eq, %228, %229 : vector<1x128xi32>
    %cst_111 = arith.constant 0.000000e+00 : f32
    %231 = vector.shape_cast %227 : vector<1x1xf32> to vector<1x1xf32>
    %232 = vector.broadcast %231 : vector<1x1xf32> to vector<1x128xf32>
    %233 = vector.broadcast %cst_111 : f32 to vector<1x128xf32>
    %234 = arith.select %230, %232, %233 : vector<1x128xi1>, vector<1x128xf32>
    %c1_i32_112 = arith.constant 1 : i32
    %235 = vector.broadcast %c1_i32_112 : i32 to vector<1x128xi32>
    %236 = arith.cmpi eq, %228, %235 : vector<1x128xi32>
    %cst_113 = arith.constant 0.000000e+00 : f32
    %237 = vector.shape_cast %219 : vector<1x1xf32> to vector<1x1xf32>
    %238 = vector.broadcast %237 : vector<1x1xf32> to vector<1x128xf32>
    %239 = vector.broadcast %cst_113 : f32 to vector<1x128xf32>
    %240 = arith.select %236, %238, %239 : vector<1x128xi1>, vector<1x128xf32>
    %241 = arith.addf %234, %240 : vector<1x128xf32>
    %c2_i32 = arith.constant 2 : i32
    %242 = vector.broadcast %c2_i32 : i32 to vector<1x128xi32>
    %243 = arith.cmpi eq, %228, %242 : vector<1x128xi32>
    %cst_114 = arith.constant 0.000000e+00 : f32
    %244 = vector.shape_cast %180 : vector<1x1xf32> to vector<1x1xf32>
    %245 = vector.broadcast %244 : vector<1x1xf32> to vector<1x128xf32>
    %246 = vector.broadcast %cst_114 : f32 to vector<1x128xf32>
    %247 = arith.select %243, %245, %246 : vector<1x128xi1>, vector<1x128xf32>
    %248 = arith.addf %241, %247 : vector<1x128xf32>
    %c3_i32 = arith.constant 3 : i32
    %249 = vector.broadcast %c3_i32 : i32 to vector<1x128xi32>
    %250 = arith.cmpi eq, %228, %249 : vector<1x128xi32>
    %cst_115 = arith.constant 0.000000e+00 : f32
    %251 = vector.shape_cast %78 : vector<1x1xf32> to vector<1x1xf32>
    %252 = vector.broadcast %251 : vector<1x1xf32> to vector<1x128xf32>
    %253 = vector.broadcast %cst_115 : f32 to vector<1x128xf32>
    %254 = arith.select %250, %252, %253 : vector<1x128xi1>, vector<1x128xf32>
    %255 = arith.addf %248, %254 : vector<1x128xf32>
    %c4_i32 = arith.constant 4 : i32
    %256 = vector.broadcast %c4_i32 : i32 to vector<1x128xi32>
    %257 = arith.cmpi eq, %228, %256 : vector<1x128xi32>
    %cst_116 = arith.constant 0.000000e+00 : f32
    %258 = vector.shape_cast %126 : vector<1x1xf32> to vector<1x1xf32>
    %259 = vector.broadcast %258 : vector<1x1xf32> to vector<1x128xf32>
    %260 = vector.broadcast %cst_116 : f32 to vector<1x128xf32>
    %261 = arith.select %257, %259, %260 : vector<1x128xi1>, vector<1x128xf32>
    %262 = arith.addf %255, %261 : vector<1x128xf32>
    %c5_i32 = arith.constant 5 : i32
    %263 = vector.broadcast %c5_i32 : i32 to vector<1x128xi32>
    %264 = arith.cmpi eq, %228, %263 : vector<1x128xi32>
    %cst_117 = arith.constant 0.000000e+00 : f32
    %265 = vector.shape_cast %179 : vector<1x1xf32> to vector<1x1xf32>
    %266 = vector.broadcast %265 : vector<1x1xf32> to vector<1x128xf32>
    %267 = vector.broadcast %cst_117 : f32 to vector<1x128xf32>
    %268 = arith.select %264, %266, %267 : vector<1x128xi1>, vector<1x128xf32>
    %269 = arith.addf %262, %268 : vector<1x128xf32>
    %c0_118 = arith.constant 0 : index
    %c0_119 = arith.constant 0 : index
    %270 = vector.load %arg4[%c0_118, %c0_119] : memref<1x128xf32, #tpu.memory_space<vmem>>, vector<1x128xf32>
    tpu.vector_store %arg4[%c0_118, %c0_119], %269 {strides = array<i32>} : memref<1x128xf32, #tpu.memory_space<vmem>>, vector<1x128xf32>,
    return
  }
}

</mosaic_0001>

<llo_original>
// kernel: hqvae_forward.1
$region0: #{hqvae_forward.1}
  #allocation0 [shape = 'u32[]', space=smem, size = 0x4, offset = 0x4, fixed_abs, tag = 'smem constant byte address 0x4 - core index']
  #allocation1 [shape = 'u32[144,128]{1,0:T(1,128)}', space=vmem, size = 0x12000, scoped, tag = 'internal scratch']
  %s0 = inlined_call_operand.hbm [shape: f32[552,128], index: 0, kind: input, shape index: {}]
  %s1 = inlined_call_operand.vmem [shape: f32[2,128], index: 1, kind: input, shape index: {}]
  %s2 = inlined_call_operand.vmem [shape: f32[2,128], index: 2, kind: output, shape index: {0}]
  %s3 = inlined_call_operand.vmem [shape: s32[2,128], index: 3, kind: output, shape index: {1}]
  %s4 = inlined_call_operand.vmem [shape: f32[1,128], index: 4, kind: output, shape index: {2}]
  %5 = xla_tuple %s2, %s3, %s4
  %s6 = sld [smem:[#allocation0]]
  $region38: #{hqvae_forward.1} parent=0
    _
  %s8 = ssub.s32 1, %s6
  %s9 = scalar_select 0, %s8, %s6
  $region1: #{hqvae_forward.1} parent=0
    #allocation2 [shape = 'u8[282624]{0}', space=vmem, size = 0x45000, scoped, tag = 'input window, operand 0, single buffered']
    #allocation3 [shape = 's32[1]{0}', space=sflag, size = 0x4, scoped, tag = 'scoped memory for hqvae_forward.1']
    %10 = vsyncpa [#allocation3], 0
    // Predicated region
    $region2: #{hqvae_forward.1} parent=1 // pred_check
      _
    $region3: #{hqvae_forward.1} parent=1 // pred_check_branch
      %12 = sbr.rel (0) target = $region5
    $region4: #{hqvae_forward.1} parent=1 // pred_region
      %s14 = ssub.s32 8832, 8832
      %15 = vsyncadd [#allocation3], %s14
      %s16 = sshll.u32 [#allocation2], 4
      %s17 = int_to_ptr.vmem [resolvable:$true] %s16
      %22 = dma.hbm_to_vmem [thread:$0]  %s0, 8832, %s17, [#allocation3], 128, 128, 8
    $region5: #{hqvae_forward.1} parent=1 // pred_fallthru
      _
    // Predicated region
    $region6: #{hqvae_forward.1} parent=1 // pred_check
      _
    $region7: #{hqvae_forward.1} parent=1 // pred_check_branch
      %24 = sbr.rel (0) target = $region9
    $region8: #{hqvae_forward.1} parent=1 // pred_region
      _
    $region9: #{hqvae_forward.1} parent=1 // pred_fallthru
      _
    // Predicated region
    $region10: #{hqvae_forward.1} parent=1 // pred_check
      _
    $region11: #{hqvae_forward.1} parent=1 // pred_check_branch
      %26 = sbr.rel (0) target = $region13
    $region12: #{hqvae_forward.1} parent=1 // pred_region
      %27 = dma.done [#allocation3], 8832
    $region13: #{hqvae_forward.1} parent=1 // pred_fallthru
      _
    %v28 = vld [vmem:[%s1] sm:$0x3]
    %29 = vst [vmem:[%s2] sm:$0x3] 0.0
    %v30 = vld [vmem:[#allocation2] sm:$0xff]
    %v31 = vld [vmem:[#allocation2 + $0x8] sm:$0xff]
    %v32 = vld [vmem:[#allocation2 + $0x10] sm:$0xff]
    %v33 = vld [vmem:[#allocation2 + $0x18] sm:$0xff]
    %v34 = vld [vmem:[#allocation2 + $0x20] sm:$0x1]
    %v35 = vlaneseq
    %v36 = vshrl.u32 %v35, 7
    %v37 = vsub.s32 0, %v36
    %v38 = vrot.slane %v34, %v37
    %vm39 = vcmask 261120
    %v41 = vsel %vm39, %v28, 0
    %43 = vmatprep.subr.mxu0 0.0
    %44 = vmatpush1.msra.mxu0 %v30
    %45 = vmatprep.subr.mxu0 0.0
    %46 = vmatpush1.msra.mxu0 %v31
    %47 = vmatprep.subr.mxu0 0.0
    %48 = vmatpush1.msra.mxu0 %v32
    %49 = vmatprep.subr.mxu0 0.0
    %50 = vmatpush1.msra.mxu0 %v33
    %51 = vmatprep.subr.mxu0 0.0
    %52 = vmatpush1.msra.mxu0 0.0
    %53 = vmatprep.subr.mxu0 0.0
    %54 = vmatpush1.msra.mxu0 0.0
    %55 = vmatprep.subr.mxu0 0.0
    %56 = vmatpush1.msra.mxu0 0.0
    %57 = vmatprep.subr.mxu0 0.0
    %58 = vmatpush1.msra.mxu0 0.0
    %59 = vmatprep.subr.mxu0 0.0
    %60 = vmatpush1.msra.mxu0 0.0
    %61 = vmatprep.subr.mxu0 0.0
    %62 = vmatpush1.msra.mxu0 0.0
    %63 = vmatprep.subr.mxu0 0.0
    %64 = vmatpush1.msra.mxu0 0.0
    %65 = vmatprep.subr.mxu0 0.0
    %66 = vmatpush1.msra.mxu0 0.0
    %67 = vmatprep.subr.mxu0 0.0
    %68 = vmatpush1.msra.mxu0 0.0
    %69 = vmatprep.subr.mxu0 0.0
    %70 = vmatpush1.msra.mxu0 0.0
    %71 = vmatprep.subr.mxu0 0.0
    %72 = vmatpush1.msra.mxu0 0.0
    %73 = vmatprep.subr.mxu0 0.0
    %74 = vmatpush1.msra.mxu0 0.0
    %75 = vmatprep.subr.mxu0 0.0
    %76 = vmatpush1.msra.mxu0 0.0
    %77 = vmatprep.subr.mxu0 0.0
    %78 = vmatpush1.msra.mxu0 0.0
    %79 = vmatprep.subr.mxu0 0.0
    %80 = vmatpush1.msra.mxu0 0.0
    %81 = vmatprep.subr.mxu0 0.0
    %82 = vmatpush1.msra.mxu0 0.0
    %83 = vmatprep.subr.mxu0 0.0
    %84 = vmatpush1.msra.mxu0 0.0
    %85 = vmatprep.subr.mxu0 0.0
    %86 = vmatpush1.msra.mxu0 0.0
    %87 = vmatprep.subr.mxu0 0.0
    %88 = vmatpush1.msra.mxu0 0.0
    %89 = vmatprep.subr.mxu0 0.0
    %90 = vmatpush1.msra.mxu0 0.0
    %91 = vmatprep.subr.mxu0 0.0
    %92 = vmatpush1.msra.mxu0 0.0
    %93 = vmatprep.subr.mxu0 0.0
    %94 = vmatpush1.msra.mxu0 0.0
    %95 = vmatprep.subr.mxu0 0.0
    %96 = vmatpush1.msra.mxu0 0.0
    %97 = vmatprep.subr.mxu0 0.0
    %98 = vmatpush1.msra.mxu0 0.0
    %99 = vmatprep.subr.mxu0 0.0
    %100 = vmatpush1.msra.mxu0 0.0
    %101 = vmatprep.subr.mxu0 0.0
    %102 = vmatpush1.msra.mxu0 0.0
    %103 = vmatprep.subr.mxu0 0.0
    %104 = vmatpush1.msra.mxu0 0.0
    %105 = vmatprep.subr.mxu0 0.0
    %106 = vmatpush1.msra.mxu0 0.0
    %107 = vmatprep.mubr.f32.mxu0 0.0
    %108 = vmatmul.mubr.f32.gmra.mrb[0].mxu0 %v41
    %v109 = vpop.f32.mrb[0].mxu0
    %v110 = vadd.f32 %v38, %v109
    %v111 = vpop.f32.mrb[0].mxu0
    %112 = vdwg.mxu0
    %v113 = vmax.f32 %v110, 0.0
    %v114 = vld [vmem:[#allocation2 + $0x28] sm:$0xff]
    %v115 = vld [vmem:[#allocation2 + $0x30] sm:$0xff]
    %v116 = vld [vmem:[#allocation2 + $0x38] sm:$0xff]
    %v117 = vld [vmem:[#allocation2 + $0x40] sm:$0xff]
    %v118 = vld [vmem:[#allocation2 + $0x48] sm:$0xff]
    %v119 = vld [vmem:[#allocation2 + $0x50] sm:$0xff]
    %v120 = vld [vmem:[#allocation2 + $0x58] sm:$0xff]
    %v121 = vld [vmem:[#allocation2 + $0x60] sm:$0xff]
    %v122 = vld [vmem:[#allocation2 + $0x68] sm:$0x1]
    %v123 = vlaneseq
    %v124 = vshrl.u32 %v123, 7
    %v125 = vsub.s32 0, %v124
    %v126 = vrot.slane %v122, %v125
    %vm127 = vcmask 523264
    %v129 = vsel %vm127, %v113, 0
    %131 = vmatprep.subr.mxu0 0.0
    %132 = vmatpush1.msra.mxu0 %v114
    %133 = vmatprep.subr.mxu0 0.0
    %134 = vmatpush1.msra.mxu0 %v115
    %135 = vmatprep.subr.mxu0 0.0
    %136 = vmatpush1.msra.mxu0 %v116
    %137 = vmatprep.subr.mxu0 0.0
    %138 = vmatpush1.msra.mxu0 %v117
    %139 = vmatprep.subr.mxu0 0.0
    %140 = vmatpush1.msra.mxu0 %v118
    %141 = vmatprep.subr.mxu0 0.0
    %142 = vmatpush1.msra.mxu0 %v119
    %143 = vmatprep.subr.mxu0 0.0
    %144 = vmatpush1.msra.mxu0 %v120
    %145 = vmatprep.subr.mxu0 0.0
    %146 = vmatpush1.msra.mxu0 %v121
    %147 = vmatprep.subr.mxu0 0.0
    %148 = vmatpush1.msra.mxu0 0.0
    %149 = vmatprep.subr.mxu0 0.0
    %150 = vmatpush1.msra.mxu0 0.0
    %151 = vmatprep.subr.mxu0 0.0
    %152 = vmatpush1.msra.mxu0 0.0
    %153 = vmatprep.subr.mxu0 0.0
    %154 = vmatpush1.msra.mxu0 0.0
    %155 = vmatprep.subr.mxu0 0.0
    %156 = vmatpush1.msra.mxu0 0.0
    %157 = vmatprep.subr.mxu0 0.0
    %158 = vmatpush1.msra.mxu0 0.0
    %159 = vmatprep.subr.mxu0 0.0
    %160 = vmatpush1.msra.mxu0 0.0
    %161 = vmatprep.subr.mxu0 0.0
    %162 = vmatpush1.msra.mxu0 0.0
    %163 = vmatprep.subr.mxu0 0.0
    %164 = vmatpush1.msra.mxu0 0.0
    %165 = vmatprep.subr.mxu0 0.0
    %166 = vmatpush1.msra.mxu0 0.0
    %167 = vmatprep.subr.mxu0 0.0
    %168 = vmatpush1.msra.mxu0 0.0
    %169 = vmatprep.subr.mxu0 0.0
    %170 = vmatpush1.msra.mxu0 0.0
    %171 = vmatprep.subr.mxu0 0.0
    %172 = vmatpush1.msra.mxu0 0.0
    %173 = vmatprep.subr.mxu0 0.0
    %174 = vmatpush1.msra.mxu0 0.0
    %175 = vmatprep.subr.mxu0 0.0
    %176 = vmatpush1.msra.mxu0 0.0
    %177 = vmatprep.subr.mxu0 0.0
    %178 = vmatpush1.msra.mxu0 0.0
    %179 = vmatprep.subr.mxu0 0.0
    %180 = vmatpush1.msra.mxu0 0.0
    %181 = vmatprep.subr.mxu0 0.0
    %182 = vmatpush1.msra.mxu0 0.0
    %183 = vmatprep.subr.mxu0 0.0
    %184 = vmatpush1.msra.mxu0 0.0
    %185 = vmatprep.subr.mxu0 0.0
    %186 = vmatpush1.msra.mxu0 0.0
    %187 = vmatprep.subr.mxu0 0.0
    %188 = vmatpush1.msra.mxu0 0.0
    %189 = vmatprep.subr.mxu0 0.0
    %190 = vmatpush1.msra.mxu0 0.0
    %191 = vmatprep.subr.mxu0 0.0
    %192 = vmatpush1.msra.mxu0 0.0
    %193 = vmatprep.subr.mxu0 0.0
    %194 = vmatpush1.msra.mxu0 0.0
    %195 = vmatprep.mubr.f32.mxu0 0.0
    %196 = vmatmul.mubr.f32.gmra.mrb[0].mxu0 %v129
    %v197 = vpop.f32.mrb[0].mxu0
    %v198 = vadd.f32 %v126, %v197
    %v199 = vpop.f32.mrb[0].mxu0
    %200 = vdwg.mxu0
    %v201 = vmax.f32 %v198, 0.0
    %v202 = vld [vmem:[#allocation2 + $0x70] sm:$0xff]
    %v203 = vld [vmem:[#allocation2 + $0x78] sm:$0xff]
    %v204 = vld [vmem:[#allocation2 + $0x80] sm:$0xff]
    %v205 = vld [vmem:[#allocation2 + $0x88] sm:$0xff]
    %v206 = vld [vmem:[#allocation2 + $0x90] sm:$0x1]
    %v207 = vlaneseq
    %v208 = vshrl.u32 %v207, 7
    %v209 = vsub.s32 0, %v208
    %v210 = vrot.slane %v206, %v209
    %v212 = vsel %vm39, %v201, 0
    %214 = vmatprep.subr.mxu0 0.0
    %215 = vmatpush1.msra.mxu0 %v202
    %216 = vmatprep.subr.mxu0 0.0
    %217 = vmatpush1.msra.mxu0 %v203
    %218 = vmatprep.subr.mxu0 0.0
    %219 = vmatpush1.msra.mxu0 %v204
    %220 = vmatprep.subr.mxu0 0.0
    %221 = vmatpush1.msra.mxu0 %v205
    %222 = vmatprep.subr.mxu0 0.0
    %223 = vmatpush1.msra.mxu0 0.0
    %224 = vmatprep.subr.mxu0 0.0
    %225 = vmatpush1.msra.mxu0 0.0
    %226 = vmatprep.subr.mxu0 0.0
    %227 = vmatpush1.msra.mxu0 0.0
    %228 = vmatprep.subr.mxu0 0.0
    %229 = vmatpush1.msra.mxu0 0.0
    %230 = vmatprep.subr.mxu0 0.0
    %231 = vmatpush1.msra.mxu0 0.0
    %232 = vmatprep.subr.mxu0 0.0
    %233 = vmatpush1.msra.mxu0 0.0
    %234 = vmatprep.subr.mxu0 0.0
    %235 = vmatpush1.msra.mxu0 0.0
    %236 = vmatprep.subr.mxu0 0.0
    %237 = vmatpush1.msra.mxu0 0.0
    %238 = vmatprep.subr.mxu0 0.0
    %239 = vmatpush1.msra.mxu0 0.0
    %240 = vmatprep.subr.mxu0 0.0
    %241 = vmatpush1.msra.mxu0 0.0
    %242 = vmatprep.subr.mxu0 0.0
    %243 = vmatpush1.msra.mxu0 0.0
    %244 = vmatprep.subr.mxu0 0.0
    %245 = vmatpush1.msra.mxu0 0.0
    %246 = vmatprep.subr.mxu0 0.0
    %247 = vmatpush1.msra.mxu0 0.0
    %248 = vmatprep.subr.mxu0 0.0
    %249 = vmatpush1.msra.mxu0 0.0
    %250 = vmatprep.subr.mxu0 0.0
    %251 = vmatpush1.msra.mxu0 0.0
    %252 = vmatprep.subr.mxu0 0.0
    %253 = vmatpush1.msra.mxu0 0.0
    %254 = vmatprep.subr.mxu0 0.0
    %255 = vmatpush1.msra.mxu0 0.0
    %256 = vmatprep.subr.mxu0 0.0
    %257 = vmatpush1.msra.mxu0 0.0
    %258 = vmatprep.subr.mxu0 0.0
    %259 = vmatpush1.msra.mxu0 0.0
    %260 = vmatprep.subr.mxu0 0.0
    %261 = vmatpush1.msra.mxu0 0.0
    %262 = vmatprep.subr.mxu0 0.0
    %263 = vmatpush1.msra.mxu0 0.0
    %264 = vmatprep.subr.mxu0 0.0
    %265 = vmatpush1.msra.mxu0 0.0
    %266 = vmatprep.subr.mxu0 0.0
    %267 = vmatpush1.msra.mxu0 0.0
    %268 = vmatprep.subr.mxu0 0.0
    %269 = vmatpush1.msra.mxu0 0.0
    %270 = vmatprep.subr.mxu0 0.0
    %271 = vmatpush1.msra.mxu0 0.0
    %272 = vmatprep.subr.mxu0 0.0
    %273 = vmatpush1.msra.mxu0 0.0
    %274 = vmatprep.subr.mxu0 0.0
    %275 = vmatpush1.msra.mxu0 0.0
    %276 = vmatprep.subr.mxu0 0.0
    %277 = vmatpush1.msra.mxu0 0.0
    %278 = vmatprep.mubr.f32.mxu0 0.0
    %279 = vmatmul.mubr.f32.gmra.mrb[0].mxu0 %v212
    %v280 = vpop.f32.mrb[0].mxu0
    %v281 = vadd.f32 %v210, %v280
    %v282 = vpop.f32.mrb[0].mxu0
    %283 = vdwg.mxu0
    %285 = vrot.lane.b32.xlu0 %v281, 32
    %v286 = vpop.permute.xlu0 %285
    %vm288 = vcmask 386304
    %289 = vst.msk [vmem:[%s2] sm:$0x3] %vm288, %v286
    %v290 = vld [vmem:[#allocation2 + $0x98] sm:$0xff]
    %v291 = vld [vmem:[#allocation2 + $0xa0] sm:$0xff]
    %v292 = vld [vmem:[#allocation2 + $0xa8] sm:$0xff]
    %v293 = vld [vmem:[#allocation2 + $0xb0] sm:$0xff]
    %v294 = vld [vmem:[#allocation2 + $0xb8] sm:$0x1]
    %v295 = vlaneseq
    %v296 = vshrl.u32 %v295, 7
    %v297 = vsub.s32 0, %v296
    %v298 = vrot.slane %v294, %v297
    %299 = vmatprep.subr.mxu0 0.0
    %300 = vmatpush1.msra.mxu0 %v290
    %301 = vmatprep.subr.mxu0 0.0
    %302 = vmatpush1.msra.mxu0 %v291
    %303 = vmatprep.subr.mxu0 0.0
    %304 = vmatpush1.msra.mxu0 %v292
    %305 = vmatprep.subr.mxu0 0.0
    %306 = vmatpush1.msra.mxu0 %v293
    %307 = vmatprep.subr.mxu0 0.0
    %308 = vmatpush1.msra.mxu0 0.0
    %309 = vmatprep.subr.mxu0 0.0
    %310 = vmatpush1.msra.mxu0 0.0
    %311 = vmatprep.subr.mxu0 0.0
    %312 = vmatpush1.msra.mxu0 0.0
    %313 = vmatprep.subr.mxu0 0.0
    %314 = vmatpush1.msra.mxu0 0.0
    %315 = vmatprep.subr.mxu0 0.0
    %316 = vmatpush1.msra.mxu0 0.0
    %317 = vmatprep.subr.mxu0 0.0
    %318 = vmatpush1.msra.mxu0 0.0
    %319 = vmatprep.subr.mxu0 0.0
    %320 = vmatpush1.msra.mxu0 0.0
    %321 = vmatprep.subr.mxu0 0.0
    %322 = vmatpush1.msra.mxu0 0.0
    %323 = vmatprep.subr.mxu0 0.0
    %324 = vmatpush1.msra.mxu0 0.0
    %325 = vmatprep.subr.mxu0 0.0
    %326 = vmatpush1.msra.mxu0 0.0
    %327 = vmatprep.subr.mxu0 0.0
    %328 = vmatpush1.msra.mxu0 0.0
    %329 = vmatprep.subr.mxu0 0.0
    %330 = vmatpush1.msra.mxu0 0.0
    %331 = vmatprep.subr.mxu0 0.0
    %332 = vmatpush1.msra.mxu0 0.0
    %333 = vmatprep.subr.mxu0 0.0
    %334 = vmatpush1.msra.mxu0 0.0
    %335 = vmatprep.subr.mxu0 0.0
    %336 = vmatpush1.msra.mxu0 0.0
    %337 = vmatprep.subr.mxu0 0.0
    %338 = vmatpush1.msra.mxu0 0.0
    %339 = vmatprep.subr.mxu0 0.0
    %340 = vmatpush1.msra.mxu0 0.0
    %341 = vmatprep.subr.mxu0 0.0
    %342 = vmatpush1.msra.mxu0 0.0
    %343 = vmatprep.subr.mxu0 0.0
    %344 = vmatpush1.msra.mxu0 0.0
    %345 = vmatprep.subr.mxu0 0.0
    %346 = vmatpush1.msra.mxu0 0.0
    %347 = vmatprep.subr.mxu0 0.0
    %348 = vmatpush1.msra.mxu0 0.0
    %349 = vmatprep.subr.mxu0 0.0
    %350 = vmatpush1.msra.mxu0 0.0
    %351 = vmatprep.subr.mxu0 0.0
    %352 = vmatpush1.msra.mxu0 0.0
    %353 = vmatprep.subr.mxu0 0.0
    %354 = vmatpush1.msra.mxu0 0.0
    %355 = vmatprep.subr.mxu0 0.0
    %356 = vmatpush1.msra.mxu0 0.0
    %357 = vmatprep.subr.mxu0 0.0
    %358 = vmatpush1.msra.mxu0 0.0
    %359 = vmatprep.subr.mxu0 0.0
    %360 = vmatpush1.msra.mxu0 0.0
    %361 = vmatprep.subr.mxu0 0.0
    %362 = vmatpush1.msra.mxu0 0.0
    %363 = vmatprep.mubr.f32.mxu0 0.0
    %364 = vmatmul.mubr.f32.gmra.mrb[0].mxu0 %v212
    %v365 = vpop.f32.mrb[0].mxu0
    %v366 = vadd.f32 %v298, %v365
    %v367 = vpop.f32.mrb[0].mxu0
    %368 = vdwg.mxu0
    %370 = vrot.lane.b32.xlu0 %v366, 48
    %v371 = vpop.permute.xlu0 %370
    %vm373 = vcmask 451968
    %374 = vst.msk [vmem:[%s2] sm:$0x3] %vm373, %v371
    %v375 = vld [vmem:[#allocation2 + $0xd8] sm:$0x1]
    %v376 = vld [vmem:[#allocation2 + $0xf8] sm:$0x1]
    %v377 = vld [vmem:[#allocation2 + $0xc0] sm:$0xff]
    %v378 = vld [vmem:[#allocation2 + $0xc8] sm:$0xff]
    %vm379 = vcmask 130048
    %v380 = vsel %vm379, %v281, 0
    %382 = vmatprep.subr.mxu0 0.0
    %383 = vmatpush1.msra.mxu0 %v377
    %384 = vmatprep.subr.mxu0 0.0
    %385 = vmatpush1.msra.mxu0 %v378
    %386 = vmatprep.subr.mxu0 0.0
    %387 = vmatpush1.msra.mxu0 0.0
    %388 = vmatprep.subr.mxu0 0.0
    %389 = vmatpush1.msra.mxu0 0.0
    %390 = vmatprep.subr.mxu0 0.0
    %391 = vmatpush1.msra.mxu0 0.0
    %392 = vmatprep.subr.mxu0 0.0
    %393 = vmatpush1.msra.mxu0 0.0
    %394 = vmatprep.subr.mxu0 0.0
    %395 = vmatpush1.msra.mxu0 0.0
    %396 = vmatprep.subr.mxu0 0.0
    %397 = vmatpush1.msra.mxu0 0.0
    %398 = vmatprep.subr.mxu0 0.0
    %399 = vmatpush1.msra.mxu0 0.0
    %400 = vmatprep.subr.mxu0 0.0
    %401 = vmatpush1.msra.mxu0 0.0
    %402 = vmatprep.subr.mxu0 0.0
    %403 = vmatpush1.msra.mxu0 0.0
    %404 = vmatprep.subr.mxu0 0.0
    %405 = vmatpush1.msra.mxu0 0.0
    %406 = vmatprep.subr.mxu0 0.0
    %407 = vmatpush1.msra.mxu0 0.0
    %408 = vmatprep.subr.mxu0 0.0
    %409 = vmatpush1.msra.mxu0 0.0
    %410 = vmatprep.subr.mxu0 0.0
    %411 = vmatpush1.msra.mxu0 0.0
    %412 = vmatprep.subr.mxu0 0.0
    %413 = vmatpush1.msra.mxu0 0.0
    %414 = vmatprep.subr.mxu0 0.0
    %415 = vmatpush1.msra.mxu0 0.0
    %416 = vmatprep.subr.mxu0 0.0
    %417 = vmatpush1.msra.mxu0 0.0
    %418 = vmatprep.subr.mxu0 0.0
    %419 = vmatpush1.msra.mxu0 0.0
    %420 = vmatprep.subr.mxu0 0.0
    %421 = vmatpush1.msra.mxu0 0.0
    %422 = vmatprep.subr.mxu0 0.0
    %423 = vmatpush1.msra.mxu0 0.0
    %424 = vmatprep.subr.mxu0 0.0
    %425 = vmatpush1.msra.mxu0 0.0
    %426 = vmatprep.subr.mxu0 0.0
    %427 = vmatpush1.msra.mxu0 0.0
    %428 = vmatprep.subr.mxu0 0.0
    %429 = vmatpush1.msra.mxu0 0.0
    %430 = vmatprep.subr.mxu0 0.0
    %431 = vmatpush1.msra.mxu0 0.0
    %432 = vmatprep.subr.mxu0 0.0
    %433 = vmatpush1.msra.mxu0 0.0
    %434 = vmatprep.subr.mxu0 0.0
    %435 = vmatpush1.msra.mxu0 0.0
    %436 = vmatprep.subr.mxu0 0.0
    %437 = vmatpush1.msra.mxu0 0.0
    %438 = vmatprep.subr.mxu0 0.0
    %439 = vmatpush1.msra.mxu0 0.0
    %440 = vmatprep.subr.mxu0 0.0
    %441 = vmatpush1.msra.mxu0 0.0
    %442 = vmatprep.subr.mxu0 0.0
    %443 = vmatpush1.msra.mxu0 0.0
    %444 = vmatprep.subr.mxu0 0.0
    %445 = vmatpush1.msra.mxu0 0.0
    %446 = vmatprep.mubr.f32.mxu0 0.0
    %447 = vmatmul.mubr.f32.gmra.mrb[0].mxu0 %v380
    %v448 = vpop.f32.mrb[0].mxu0
    %v449 = vadd.f32 0.0, %v448
    %v450 = vpop.f32.mrb[0].mxu0
    %451 = vdwg.mxu0
    %v452 = vlaneseq
    %v453 = vshrl.u32 %v452, 7
    %v454 = vsub.s32 0, %v453
    %v455 = vrot.slane %v375, %v454
    %v456 = vadd.f32 %v455, %v449
    %v457 = vld [vmem:[#allocation2 + $0xe0] sm:$0xff]
    %v458 = vld [vmem:[#allocation2 + $0xe8] sm:$0xff]
    %459 = vmatprep.subr.mxu0 0.0
    %460 = vmatpush1.msra.mxu0 %v457
    %461 = vmatprep.subr.mxu0 0.0
    %462 = vmatpush1.msra.mxu0 %v458
    %463 = vmatprep.subr.mxu0 0.0
    %464 = vmatpush1.msra.mxu0 0.0
    %465 = vmatprep.subr.mxu0 0.0
    %466 = vmatpush1.msra.mxu0 0.0
    %467 = vmatprep.subr.mxu0 0.0
    %468 = vmatpush1.msra.mxu0 0.0
    %469 = vmatprep.subr.mxu0 0.0
    %470 = vmatpush1.msra.mxu0 0.0
    %471 = vmatprep.subr.mxu0 0.0
    %472 = vmatpush1.msra.mxu0 0.0
    %473 = vmatprep.subr.mxu0 0.0
    %474 = vmatpush1.msra.mxu0 0.0
    %475 = vmatprep.subr.mxu0 0.0
    %476 = vmatpush1.msra.mxu0 0.0
    %477 = vmatprep.subr.mxu0 0.0
    %478 = vmatpush1.msra.mxu0 0.0
    %479 = vmatprep.subr.mxu0 0.0
    %480 = vmatpush1.msra.mxu0 0.0
    %481 = vmatprep.subr.mxu0 0.0
    %482 = vmatpush1.msra.mxu0 0.0
    %483 = vmatprep.subr.mxu0 0.0
    %484 = vmatpush1.msra.mxu0 0.0
    %485 = vmatprep.subr.mxu0 0.0
    %486 = vmatpush1.msra.mxu0 0.0
    %487 = vmatprep.subr.mxu0 0.0
    %488 = vmatpush1.msra.mxu0 0.0
    %489 = vmatprep.subr.mxu0 0.0
    %490 = vmatpush1.msra.mxu0 0.0
    %491 = vmatprep.subr.mxu0 0.0
    %492 = vmatpush1.msra.mxu0 0.0
    %493 = vmatprep.subr.mxu0 0.0
    %494 = vmatpush1.msra.mxu0 0.0
    %495 = vmatprep.subr.mxu0 0.0
    %496 = vmatpush1.msra.mxu0 0.0
    %497 = vmatprep.subr.mxu0 0.0
    %498 = vmatpush1.msra.mxu0 0.0
    %499 = vmatprep.subr.mxu0 0.0
    %500 = vmatpush1.msra.mxu0 0.0
    %501 = vmatprep.subr.mxu0 0.0
    %502 = vmatpush1.msra.mxu0 0.0
    %503 = vmatprep.subr.mxu0 0.0
    %504 = vmatpush1.msra.mxu0 0.0
    %505 = vmatprep.subr.mxu0 0.0
    %506 = vmatpush1.msra.mxu0 0.0
    %507 = vmatprep.subr.mxu0 0.0
    %508 = vmatpush1.msra.mxu0 0.0
    %509 = vmatprep.subr.mxu0 0.0
    %510 = vmatpush1.msra.mxu0 0.0
    %511 = vmatprep.subr.mxu0 0.0
    %512 = vmatpush1.msra.mxu0 0.0
    %513 = vmatprep.subr.mxu0 0.0
    %514 = vmatpush1.msra.mxu0 0.0
    %515 = vmatprep.subr.mxu0 0.0
    %516 = vmatpush1.msra.mxu0 0.0
    %517 = vmatprep.subr.mxu0 0.0
    %518 = vmatpush1.msra.mxu0 0.0
    %519 = vmatprep.subr.mxu0 0.0
    %520 = vmatpush1.msra.mxu0 0.0
    %521 = vmatprep.subr.mxu0 0.0
    %522 = vmatpush1.msra.mxu0 0.0
    %523 = vmatprep.mubr.f32.mxu0 0.0
    %524 = vmatmul.mubr.f32.gmra.mrb[0].mxu0 %v380
    %v525 = vpop.f32.mrb[0].mxu0
    %v526 = vadd.f32 0.0, %v525
    %v527 = vpop.f32.mrb[0].mxu0
    %528 = vdwg.mxu0
    %v529 = vlaneseq
    %v530 = vshrl.u32 %v529, 7
    %v531 = vsub.s32 0, %v530
    %v532 = vrot.slane %v376, %v531
    %v533 = vadd.f32 %v532, %v526
    %v534 = vld [vmem:[#allocation2 + $0xd0] sm:$0xff]
    %vm535 = vcmask 64512
    %v536 = vsel %vm535, %v366, 0
    %538 = vmatprep.subr.mxu0 0.0
    %539 = vmatpush1.msra.mxu0 %v534
    %540 = vmatprep.subr.mxu0 0.0
    %541 = vmatpush1.msra.mxu0 0.0
    %542 = vmatprep.subr.mxu0 0.0
    %543 = vmatpush1.msra.mxu0 0.0
    %544 = vmatprep.subr.mxu0 0.0
    %545 = vmatpush1.msra.mxu0 0.0
    %546 = vmatprep.subr.mxu0 0.0
    %547 = vmatpush1.msra.mxu0 0.0
    %548 = vmatprep.subr.mxu0 0.0
    %549 = vmatpush1.msra.mxu0 0.0
    %550 = vmatprep.subr.mxu0 0.0
    %551 = vmatpush1.msra.mxu0 0.0
    %552 = vmatprep.subr.mxu0 0.0
    %553 = vmatpush1.msra.mxu0 0.0
    %554 = vmatprep.subr.mxu0 0.0
    %555 = vmatpush1.msra.mxu0 0.0
    %556 = vmatprep.subr.mxu0 0.0
    %557 = vmatpush1.msra.mxu0 0.0
    %558 = vmatprep.subr.mxu0 0.0
    %559 = vmatpush1.msra.mxu0 0.0
    %560 = vmatprep.subr.mxu0 0.0
    %561 = vmatpush1.msra.mxu0 0.0
    %562 = vmatprep.subr.mxu0 0.0
    %563 = vmatpush1.msra.mxu0 0.0
    %564 = vmatprep.subr.mxu0 0.0
    %565 = vmatpush1.msra.mxu0 0.0
    %566 = vmatprep.subr.mxu0 0.0
    %567 = vmatpush1.msra.mxu0 0.0
    %568 = vmatprep.subr.mxu0 0.0
    %569 = vmatpush1.msra.mxu0 0.0
    %570 = vmatprep.subr.mxu0 0.0
    %571 = vmatpush1.msra.mxu0 0.0
    %572 = vmatprep.subr.mxu0 0.0
    %573 = vmatpush1.msra.mxu0 0.0
    %574 = vmatprep.subr.mxu0 0.0
    %575 = vmatpush1.msra.mxu0 0.0
    %576 = vmatprep.subr.mxu0 0.0
    %577 = vmatpush1.msra.mxu0 0.0
    %578 = vmatprep.subr.mxu0 0.0
    %579 = vmatpush1.msra.mxu0 0.0
    %580 = vmatprep.subr.mxu0 0.0
    %581 = vmatpush1.msra.mxu0 0.0
    %582 = vmatprep.subr.mxu0 0.0
    %583 = vmatpush1.msra.mxu0 0.0
    %584 = vmatprep.subr.mxu0 0.0
    %585 = vmatpush1.msra.mxu0 0.0
    %586 = vmatprep.subr.mxu0 0.0
    %587 = vmatpush1.msra.mxu0 0.0
    %588 = vmatprep.subr.mxu0 0.0
    %589 = vmatpush1.msra.mxu0 0.0
    %590 = vmatprep.subr.mxu0 0.0
    %591 = vmatpush1.msra.mxu0 0.0
    %592 = vmatprep.subr.mxu0 0.0
    %593 = vmatpush1.msra.mxu0 0.0
    %594 = vmatprep.subr.mxu0 0.0
    %595 = vmatpush1.msra.mxu0 0.0
    %596 = vmatprep.subr.mxu0 0.0
    %597 = vmatpush1.msra.mxu0 0.0
    %598 = vmatprep.subr.mxu0 0.0
    %599 = vmatpush1.msra.mxu0 0.0
    %600 = vmatprep.subr.mxu0 0.0
    %601 = vmatpush1.msra.mxu0 0.0
    %602 = vmatprep.mubr.f32.mxu0 0.0
    %603 = vmatmul.mubr.f32.gmra.mrb[0].mxu0 %v536
    %v604 = vpop.f32.mrb[0].mxu0
    %v605 = vadd.f32 0.0, %v604
    %v606 = vpop.f32.mrb[0].mxu0
    %607 = vdwg.mxu0
    %v608 = vadd.f32 %v456, %v605
    %v609 = vld [vmem:[#allocation2 + $0xf0] sm:$0xff]
    %610 = vmatprep.subr.mxu0 0.0
    %611 = vmatpush1.msra.mxu0 %v609
    %612 = vmatprep.subr.mxu0 0.0
    %613 = vmatpush1.msra.mxu0 0.0
    %614 = vmatprep.subr.mxu0 0.0
    %615 = vmatpush1.msra.mxu0 0.0
    %616 = vmatprep.subr.mxu0 0.0
    %617 = vmatpush1.msra.mxu0 0.0
    %618 = vmatprep.subr.mxu0 0.0
    %619 = vmatpush1.msra.mxu0 0.0
    %620 = vmatprep.subr.mxu0 0.0
    %621 = vmatpush1.msra.mxu0 0.0
    %622 = vmatprep.subr.mxu0 0.0
    %623 = vmatpush1.msra.mxu0 0.0
    %624 = vmatprep.subr.mxu0 0.0
    %625 = vmatpush1.msra.mxu0 0.0
    %626 = vmatprep.subr.mxu0 0.0
    %627 = vmatpush1.msra.mxu0 0.0
    %628 = vmatprep.subr.mxu0 0.0
    %629 = vmatpush1.msra.mxu0 0.0
    %630 = vmatprep.subr.mxu0 0.0
    %631 = vmatpush1.msra.mxu0 0.0
    %632 = vmatprep.subr.mxu0 0.0
    %633 = vmatpush1.msra.mxu0 0.0
    %634 = vmatprep.subr.mxu0 0.0
    %635 = vmatpush1.msra.mxu0 0.0
    %636 = vmatprep.subr.mxu0 0.0
    %637 = vmatpush1.msra.mxu0 0.0
    %638 = vmatprep.subr.mxu0 0.0
    %639 = vmatpush1.msra.mxu0 0.0
    %640 = vmatprep.subr.mxu0 0.0
    %641 = vmatpush1.msra.mxu0 0.0
    %642 = vmatprep.subr.mxu0 0.0
    %643 = vmatpush1.msra.mxu0 0.0
    %644 = vmatprep.subr.mxu0 0.0
    %645 = vmatpush1.msra.mxu0 0.0
    %646 = vmatprep.subr.mxu0 0.0
    %647 = vmatpush1.msra.mxu0 0.0
    %648 = vmatprep.subr.mxu0 0.0
    %649 = vmatpush1.msra.mxu0 0.0
    %650 = vmatprep.subr.mxu0 0.0
    %651 = vmatpush1.msra.mxu0 0.0
    %652 = vmatprep.subr.mxu0 0.0
    %653 = vmatpush1.msra.mxu0 0.0
    %654 = vmatprep.subr.mxu0 0.0
    %655 = vmatpush1.msra.mxu0 0.0
    %656 = vmatprep.subr.mxu0 0.0
    %657 = vmatpush1.msra.mxu0 0.0
    %658 = vmatprep.subr.mxu0 0.0
    %659 = vmatpush1.msra.mxu0 0.0
    %660 = vmatprep.subr.mxu0 0.0
    %661 = vmatpush1.msra.mxu0 0.0
    %662 = vmatprep.subr.mxu0 0.0
    %663 = vmatpush1.msra.mxu0 0.0
    %664 = vmatprep.subr.mxu0 0.0
    %665 = vmatpush1.msra.mxu0 0.0
    %666 = vmatprep.subr.mxu0 0.0
    %667 = vmatpush1.msra.mxu0 0.0
    %668 = vmatprep.subr.mxu0 0.0
    %669 = vmatpush1.msra.mxu0 0.0
    %670 = vmatprep.subr.mxu0 0.0
    %671 = vmatpush1.msra.mxu0 0.0
    %672 = vmatprep.subr.mxu0 0.0
    %673 = vmatpush1.msra.mxu0 0.0
    %674 = vmatprep.mubr.f32.mxu0 0.0
    %675 = vmatmul.mubr.f32.gmra.mrb[0].mxu0 %v536
    %v676 = vpop.f32.mrb[0].mxu0
    %v677 = vadd.f32 0.0, %v676
    %v678 = vpop.f32.mrb[0].mxu0
    %679 = vdwg.mxu0
    %v680 = vadd.f32 %v533, %v677
    %v681 = vmul.f32 %v680, 0.5
    %v682 = vmul.f32 %v681, 1.442695
    %v683 = vpow.pop %v682
    %685 = vrot.lane.b32.xlu0 %v683, 32
    %v686 = vpop.permute.xlu0 %685
    %v688 = vmul.f32 %v28, %v686
    %690 = vrot.lane.b32.xlu0 %v688, 96
    %v691 = vpop.permute.xlu0 %690
    %v693 = vadd.f32 %v608, %v691
    %695 = vrot.lane.b32.xlu0 %v693, 80
    %v696 = vpop.permute.xlu0 %695
    %vm698 = vcmask 714368
    %699 = vst.msk [vmem:[%s2] sm:$0x3] %vm698, %v696
    %701 = vrot.lane.b32.xlu0 %v608, 88
    %v702 = vpop.permute.xlu0 %701
    %vm704 = vcmask 779968
    %705 = vst.msk [vmem:[%s2] sm:$0x3] %vm704, %v702
    %707 = vrot.lane.b32.xlu0 %v680, 96
    %v708 = vpop.permute.xlu0 %707
    %vm710 = vcmask 845568
    %711 = vst.msk [vmem:[%s2] sm:$0x3] %vm710, %v708
    %v712 = vld [vmem:[#allocation2 + $0x100] sm:$0x1]
    %v713 = vld [vmem:[#allocation2 + $0x108] sm:$0x1]
    %v714 = vlaneseq
    %v715 = vshrl.u32 %v714, 7
    %v716 = vsub.s32 0, %v715
    %v717 = vrot.slane %v713, %v716
    %v718 = vsub.f32 %v717, %v680
    %v719 = vmul.f32 %v680, 1.442695
    %v720 = vpow.pop %v719
    %v721 = vlaneseq
    %v722 = vshrl.u32 %v721, 7
    %v723 = vsub.s32 0, %v722
    %v724 = vrot.slane %v712, %v723
    %v725 = vsub.f32 %v608, %v724
    %v726 = vmul.f32 %v725, %v725
    %v727 = vadd.f32 %v720, %v726
    %v728 = vsub.f32 0.0, %v713
    %v729 = vmul.f32 %v728, 1.442695
    %v730 = vpow.pop %v729
    %v731 = vlaneseq
    %v732 = vshrl.u32 %v731, 7
    %v733 = vsub.s32 0, %v732
    %v734 = vrot.slane %v730, %v733
    %v735 = vmul.f32 %v727, %v734
    %v736 = vadd.f32 %v718, %v735
    %v737 = vsub.f32 %v736, 1.0
    %vm738 = vcmask 58368
    %v739 = vsel %vm738, %v737, 0.0
    %740 = vadd.xlane.f32.xlu0 %v739
    %v741 = vpop.xlane.xlu0 %740
    %v742 = vmul.f32 %v741, 0.5
    %vm743 = vcmask 1041408
    %v744 = vsel %vm743, %v742, 0.0
    %v745 = vrot.slane %v744, 4
    %v746 = vadd.f32 %v744, %v745
    %v747 = vrot.slane %v746, 2
    %v748 = vadd.f32 %v746, %v747
    %v749 = vrot.slane %v748, 1
    %v750 = vadd.f32 %v748, %v749
    %v751 = vrcp.pop 2.0
    %v752 = vmul.f32 %v750, %v751
    %v753 = vlaneseq
    %v754 = vand.u32 %v753, 127
    %v755 = vld [vmem:[#allocation2 + $0x110] sm:$0xff]
    %v756 = vld [vmem:[#allocation2 + $0x118] sm:$0xff]
    %v757 = vld [vmem:[#allocation2 + $0x120] sm:$0x1]
    %v758 = vlaneseq
    %v759 = vshrl.u32 %v758, 7
    %v760 = vsub.s32 0, %v759
    %v761 = vrot.slane %v757, %v760
    %762 = vmatprep.subr.mxu0 0.0
    %763 = vmatpush1.msra.mxu0 %v755
    %764 = vmatprep.subr.mxu0 0.0
    %765 = vmatpush1.msra.mxu0 %v756
    %766 = vmatprep.subr.mxu0 0.0
    %767 = vmatpush1.msra.mxu0 0.0
    %768 = vmatprep.subr.mxu0 0.0
    %769 = vmatpush1.msra.mxu0 0.0
    %770 = vmatprep.subr.mxu0 0.0
    %771 = vmatpush1.msra.mxu0 0.0
    %772 = vmatprep.subr.mxu0 0.0
    %773 = vmatpush1.msra.mxu0 0.0
    %774 = vmatprep.subr.mxu0 0.0
    %775 = vmatpush1.msra.mxu0 0.0
    %776 = vmatprep.subr.mxu0 0.0
    %777 = vmatpush1.msra.mxu0 0.0
    %778 = vmatprep.subr.mxu0 0.0
    %779 = vmatpush1.msra.mxu0 0.0
    %780 = vmatprep.subr.mxu0 0.0
    %781 = vmatpush1.msra.mxu0 0.0
    %782 = vmatprep.subr.mxu0 0.0
    %783 = vmatpush1.msra.mxu0 0.0
    %784 = vmatprep.subr.mxu0 0.0
    %785 = vmatpush1.msra.mxu0 0.0
    %786 = vmatprep.subr.mxu0 0.0
    %787 = vmatpush1.msra.mxu0 0.0
    %788 = vmatprep.subr.mxu0 0.0
    %789 = vmatpush1.msra.mxu0 0.0
    %790 = vmatprep.subr.mxu0 0.0
    %791 = vmatpush1.msra.mxu0 0.0
    %792 = vmatprep.subr.mxu0 0.0
    %793 = vmatpush1.msra.mxu0 0.0
    %794 = vmatprep.subr.mxu0 0.0
    %795 = vmatpush1.msra.mxu0 0.0
    %796 = vmatprep.subr.mxu0 0.0
    %797 = vmatpush1.msra.mxu0 0.0
    %798 = vmatprep.subr.mxu0 0.0
    %799 = vmatpush1.msra.mxu0 0.0
    %800 = vmatprep.subr.mxu0 0.0
    %801 = vmatpush1.msra.mxu0 0.0
    %802 = vmatprep.subr.mxu0 0.0
    %803 = vmatpush1.msra.mxu0 0.0
    %804 = vmatprep.subr.mxu0 0.0
    %805 = vmatpush1.msra.mxu0 0.0
    %806 = vmatprep.subr.mxu0 0.0
    %807 = vmatpush1.msra.mxu0 0.0
    %808 = vmatprep.subr.mxu0 0.0
    %809 = vmatpush1.msra.mxu0 0.0
    %810 = vmatprep.subr.mxu0 0.0
    %811 = vmatpush1.msra.mxu0 0.0
    %812 = vmatprep.subr.mxu0 0.0
    %813 = vmatpush1.msra.mxu0 0.0
    %814 = vmatprep.subr.mxu0 0.0
    %815 = vmatpush1.msra.mxu0 0.0
    %816 = vmatprep.subr.mxu0 0.0
    %817 = vmatpush1.msra.mxu0 0.0
    %818 = vmatprep.subr.mxu0 0.0
    %819 = vmatpush1.msra.mxu0 0.0
    %820 = vmatprep.subr.mxu0 0.0
    %821 = vmatpush1.msra.mxu0 0.0
    %822 = vmatprep.subr.mxu0 0.0
    %823 = vmatpush1.msra.mxu0 0.0
    %824 = vmatprep.subr.mxu0 0.0
    %825 = vmatpush1.msra.mxu0 0.0
    %826 = vmatprep.mubr.f32.mxu0 0.0
    %827 = vmatmul.mubr.f32.gmra.mrb[0].mxu0 %v380
    %v828 = vpop.f32.mrb[0].mxu0
    %v829 = vadd.f32 %v761, %v828
    %v830 = vpop.f32.mrb[0].mxu0
    %831 = vdwg.mxu0
    %v832 = vmax.f32 %v829, 0.0
    %v833 = vld [vmem:[#allocation2 + $0x128] sm:$0xff]
    %v834 = vld [vmem:[#allocation2 + $0x130] sm:$0x1]
    %v835 = vlaneseq
    %v836 = vshrl.u32 %v835, 7
    %v837 = vsub.s32 0, %v836
    %v838 = vrot.slane %v834, %v837
    %v840 = vsel %vm535, %v832, 0
    %842 = vmatprep.subr.mxu0 0.0
    %843 = vmatpush1.msra.mxu0 %v833
    %844 = vmatprep.subr.mxu0 0.0
    %845 = vmatpush1.msra.mxu0 0.0
    %846 = vmatprep.subr.mxu0 0.0
    %847 = vmatpush1.msra.mxu0 0.0
    %848 = vmatprep.subr.mxu0 0.0
    %849 = vmatpush1.msra.mxu0 0.0
    %850 = vmatprep.subr.mxu0 0.0
    %851 = vmatpush1.msra.mxu0 0.0
    %852 = vmatprep.subr.mxu0 0.0
    %853 = vmatpush1.msra.mxu0 0.0
    %854 = vmatprep.subr.mxu0 0.0
    %855 = vmatpush1.msra.mxu0 0.0
    %856 = vmatprep.subr.mxu0 0.0
    %857 = vmatpush1.msra.mxu0 0.0
    %858 = vmatprep.subr.mxu0 0.0
    %859 = vmatpush1.msra.mxu0 0.0
    %860 = vmatprep.subr.mxu0 0.0
    %861 = vmatpush1.msra.mxu0 0.0
    %862 = vmatprep.subr.mxu0 0.0
    %863 = vmatpush1.msra.mxu0 0.0
    %864 = vmatprep.subr.mxu0 0.0
    %865 = vmatpush1.msra.mxu0 0.0
    %866 = vmatprep.subr.mxu0 0.0
    %867 = vmatpush1.msra.mxu0 0.0
    %868 = vmatprep.subr.mxu0 0.0
    %869 = vmatpush1.msra.mxu0 0.0
    %870 = vmatprep.subr.mxu0 0.0
    %871 = vmatpush1.msra.mxu0 0.0
    %872 = vmatprep.subr.mxu0 0.0
    %873 = vmatpush1.msra.mxu0 0.0
    %874 = vmatprep.subr.mxu0 0.0
    %875 = vmatpush1.msra.mxu0 0.0
    %876 = vmatprep.subr.mxu0 0.0
    %877 = vmatpush1.msra.mxu0 0.0
    %878 = vmatprep.subr.mxu0 0.0
    %879 = vmatpush1.msra.mxu0 0.0
    %880 = vmatprep.subr.mxu0 0.0
    %881 = vmatpush1.msra.mxu0 0.0
    %882 = vmatprep.subr.mxu0 0.0
    %883 = vmatpush1.msra.mxu0 0.0
    %884 = vmatprep.subr.mxu0 0.0
    %885 = vmatpush1.msra.mxu0 0.0
    %886 = vmatprep.subr.mxu0 0.0
    %887 = vmatpush1.msra.mxu0 0.0
    %888 = vmatprep.subr.mxu0 0.0
    %889 = vmatpush1.msra.mxu0 0.0
    %890 = vmatprep.subr.mxu0 0.0
    %891 = vmatpush1.msra.mxu0 0.0
    %892 = vmatprep.subr.mxu0 0.0
    %893 = vmatpush1.msra.mxu0 0.0
    %894 = vmatprep.subr.mxu0 0.0
    %895 = vmatpush1.msra.mxu0 0.0
    %896 = vmatprep.subr.mxu0 0.0
    %897 = vmatpush1.msra.mxu0 0.0
    %898 = vmatprep.subr.mxu0 0.0
    %899 = vmatpush1.msra.mxu0 0.0
    %900 = vmatprep.subr.mxu0 0.0
    %901 = vmatpush1.msra.mxu0 0.0
    %902 = vmatprep.subr.mxu0 0.0
    %903 = vmatpush1.msra.mxu0 0.0
    %904 = vmatprep.subr.mxu0 0.0
    %905 = vmatpush1.msra.mxu0 0.0
    %906 = vmatprep.mubr.f32.mxu0 0.0
    %907 = vmatmul.mubr.f32.gmra.mrb[0].mxu0 %v840
    %v908 = vpop.f32.mrb[0].mxu0
    %v909 = vadd.f32 %v838, %v908
    %v910 = vpop.f32.mrb[0].mxu0
    %911 = vdwg.mxu0
    %v912 = vld [vmem:[#allocation2 + $0x158] sm:$0xff]
    %v913 = vld [vmem:[#allocation2 + $0x160] sm:$0xff]
    %v914 = vld [vmem:[#allocation2 + $0x168] sm:$0xff]
    %v915 = vld [vmem:[#allocation2 + $0x170] sm:$0xff]
    %v916 = vld [vmem:[#allocation2 + $0x178] sm:$0x1]
    %v918 = vsel %vm379, %v909, 0
    %v921 = vsel %vm379, %v912, 0
    %v924 = vsel %vm379, %v913, 0
    %v927 = vsel %vm379, %v914, 0
    %v930 = vsel %vm379, %v915, 0
    %932 = vmatprep.subr.mxu0 0.0
    %933 = vmatpush1.xpose.msra.mxu0 %v921
    %934 = vmatprep.subr.mxu0 0.0
    %935 = vmatpush1.xpose.msra.mxu0 %v924
    %936 = vmatprep.subr.mxu0 0.0
    %937 = vmatpush1.xpose.msra.mxu0 %v927
    %938 = vmatprep.subr.mxu0 0.0
    %939 = vmatpush1.xpose.msra.mxu0 %v930
    %940 = vmatprep.subr.mxu0 0.0
    %941 = vmatpush1.xpose.msra.mxu0 0.0
    %942 = vmatprep.subr.mxu0 0.0
    %943 = vmatpush1.xpose.msra.mxu0 0.0
    %944 = vmatprep.subr.mxu0 0.0
    %945 = vmatpush1.xpose.msra.mxu0 0.0
    %946 = vmatprep.subr.mxu0 0.0
    %947 = vmatpush1.xpose.msra.mxu0 0.0
    %948 = vmatprep.subr.mxu0 0.0
    %949 = vmatpush1.xpose.msra.mxu0 0.0
    %950 = vmatprep.subr.mxu0 0.0
    %951 = vmatpush1.xpose.msra.mxu0 0.0
    %952 = vmatprep.subr.mxu0 0.0
    %953 = vmatpush1.xpose.msra.mxu0 0.0
    %954 = vmatprep.subr.mxu0 0.0
    %955 = vmatpush1.xpose.msra.mxu0 0.0
    %956 = vmatprep.subr.mxu0 0.0
    %957 = vmatpush1.xpose.msra.mxu0 0.0
    %958 = vmatprep.subr.mxu0 0.0
    %959 = vmatpush1.xpose.msra.mxu0 0.0
    %960 = vmatprep.subr.mxu0 0.0
    %961 = vmatpush1.xpose.msra.mxu0 0.0
    %962 = vmatprep.subr.mxu0 0.0
    %963 = vmatpush1.xpose.msra.mxu0 0.0
    %964 = vmatprep.subr.mxu0 0.0
    %965 = vmatpush1.xpose.msra.mxu0 0.0
    %966 = vmatprep.subr.mxu0 0.0
    %967 = vmatpush1.xpose.msra.mxu0 0.0
    %968 = vmatprep.subr.mxu0 0.0
    %969 = vmatpush1.xpose.msra.mxu0 0.0
    %970 = vmatprep.subr.mxu0 0.0
    %971 = vmatpush1.xpose.msra.mxu0 0.0
    %972 = vmatprep.subr.mxu0 0.0
    %973 = vmatpush1.xpose.msra.mxu0 0.0
    %974 = vmatprep.subr.mxu0 0.0
    %975 = vmatpush1.xpose.msra.mxu0 0.0
    %976 = vmatprep.subr.mxu0 0.0
    %977 = vmatpush1.xpose.msra.mxu0 0.0
    %978 = vmatprep.subr.mxu0 0.0
    %979 = vmatpush1.xpose.msra.mxu0 0.0
    %980 = vmatprep.subr.mxu0 0.0
    %981 = vmatpush1.xpose.msra.mxu0 0.0
    %982 = vmatprep.subr.mxu0 0.0
    %983 = vmatpush1.xpose.msra.mxu0 0.0
    %984 = vmatprep.subr.mxu0 0.0
    %985 = vmatpush1.xpose.msra.mxu0 0.0
    %986 = vmatprep.subr.mxu0 0.0
    %987 = vmatpush1.xpose.msra.mxu0 0.0
    %988 = vmatprep.subr.mxu0 0.0
    %989 = vmatpush1.xpose.msra.mxu0 0.0
    %990 = vmatprep.subr.mxu0 0.0
    %991 = vmatpush1.xpose.msra.mxu0 0.0
    %992 = vmatprep.subr.mxu0 0.0
    %993 = vmatpush1.xpose.msra.mxu0 0.0
    %994 = vmatprep.subr.mxu0 0.0
    %995 = vmatpush1.xpose.msra.mxu0 0.0
    %996 = vmatprep.mubr.f32.mxu0 0.0
    %997 = vmatmul.mubr.f32.gmra.mrb[0].mxu0 %v918
    %v998 = vpop.f32.mrb[0].mxu0
    %v999 = vadd.f32 0.0, %v998
    %v1000 = vpop.f32.mrb[0].mxu0
    %1001 = vdwg.mxu0
    %v1002 = vmul.f32 %v999, 2.0
    %v1003 = vlaneseq
    %v1004 = vshrl.u32 %v1003, 7
    %v1005 = vsub.s32 0, %v1004
    %v1006 = vrot.slane %v916, %v1005
    %v1007 = vsub.f32 %v1006, %v1002
    %vm1008 = vcmask 254976
    %v1009 = vsel %vm1008, %v1007, inf
    %1010 = vmin.xlane.f32.xlu0 %v1009
    %v1011 = vpop.xlane.xlu0 %1010
    %vm1012 = vcmp.eq.f32.partialorder %v1007, %v1011
    %v1013 = vsel %vm1012, %v754, 32
    %v1014 = vsel %vm1008, %v1013, 2147483647
    %v1015 = vand.u32 %v1014, 65535
    %v1016 = vshra.s32 %v1014, 16
    %v1017 = vcvt.s32.f32 %v1015
    %v1018 = vcvt.s32.f32 %v1016
    %1019 = vmin.xlane.f32.xlu0 %v1018
    %v1020 = vpop.xlane.xlu0 %1019
    %vm1021 = vcmp.eq.f32.partialorder %v1018, %v1020
    %v1022 = vsel %vm1021, %v1017, inf
    %1023 = vmin.xlane.f32.xlu0 %v1022
    %v1024 = vpop.xlane.xlu0 %1023
    %v1025 = vcvt.f32.s32 %v1024
    %v1026 = vcvt.f32.s32 %v1020
    %v1027 = vshll.u32 %v1026, 16
    %v1028 = vadd.s32 %v1027, %v1025
    %vm1029 = vcmp.eq.s32.totalorder %v754, %v1028
    %v1030 = vsel %vm1029, 1, 0
    %v1031 = vcvt.s32.f32 %v1030
    %v1033 = vsel %vm39, %v1031, 0
    %1035 = vmatprep.subr.mxu0 0.0
    %1036 = vmatpush1.msra.mxu0 %v912
    %1037 = vmatprep.subr.mxu0 0.0
    %1038 = vmatpush1.msra.mxu0 %v913
    %1039 = vmatprep.subr.mxu0 0.0
    %1040 = vmatpush1.msra.mxu0 %v914
    %1041 = vmatprep.subr.mxu0 0.0
    %1042 = vmatpush1.msra.mxu0 %v915
    %1043 = vmatprep.subr.mxu0 0.0
    %1044 = vmatpush1.msra.mxu0 0.0
    %1045 = vmatprep.subr.mxu0 0.0
    %1046 = vmatpush1.msra.mxu0 0.0
    %1047 = vmatprep.subr.mxu0 0.0
    %1048 = vmatpush1.msra.mxu0 0.0
    %1049 = vmatprep.subr.mxu0 0.0
    %1050 = vmatpush1.msra.mxu0 0.0
    %1051 = vmatprep.subr.mxu0 0.0
    %1052 = vmatpush1.msra.mxu0 0.0
    %1053 = vmatprep.subr.mxu0 0.0
    %1054 = vmatpush1.msra.mxu0 0.0
    %1055 = vmatprep.subr.mxu0 0.0
    %1056 = vmatpush1.msra.mxu0 0.0
    %1057 = vmatprep.subr.mxu0 0.0
    %1058 = vmatpush1.msra.mxu0 0.0
    %1059 = vmatprep.subr.mxu0 0.0
    %1060 = vmatpush1.msra.mxu0 0.0
    %1061 = vmatprep.subr.mxu0 0.0
    %1062 = vmatpush1.msra.mxu0 0.0
    %1063 = vmatprep.subr.mxu0 0.0
    %1064 = vmatpush1.msra.mxu0 0.0
    %1065 = vmatprep.subr.mxu0 0.0
    %1066 = vmatpush1.msra.mxu0 0.0
    %1067 = vmatprep.subr.mxu0 0.0
    %1068 = vmatpush1.msra.mxu0 0.0
    %1069 = vmatprep.subr.mxu0 0.0
    %1070 = vmatpush1.msra.mxu0 0.0
    %1071 = vmatprep.subr.mxu0 0.0
    %1072 = vmatpush1.msra.mxu0 0.0
    %1073 = vmatprep.subr.mxu0 0.0
    %1074 = vmatpush1.msra.mxu0 0.0
    %1075 = vmatprep.subr.mxu0 0.0
    %1076 = vmatpush1.msra.mxu0 0.0
    %1077 = vmatprep.subr.mxu0 0.0
    %1078 = vmatpush1.msra.mxu0 0.0
    %1079 = vmatprep.subr.mxu0 0.0
    %1080 = vmatpush1.msra.mxu0 0.0
    %1081 = vmatprep.subr.mxu0 0.0
    %1082 = vmatpush1.msra.mxu0 0.0
    %1083 = vmatprep.subr.mxu0 0.0
    %1084 = vmatpush1.msra.mxu0 0.0
    %1085 = vmatprep.subr.mxu0 0.0
    %1086 = vmatpush1.msra.mxu0 0.0
    %1087 = vmatprep.subr.mxu0 0.0
    %1088 = vmatpush1.msra.mxu0 0.0
    %1089 = vmatprep.subr.mxu0 0.0
    %1090 = vmatpush1.msra.mxu0 0.0
    %1091 = vmatprep.subr.mxu0 0.0
    %1092 = vmatpush1.msra.mxu0 0.0
    %1093 = vmatprep.subr.mxu0 0.0
    %1094 = vmatpush1.msra.mxu0 0.0
    %1095 = vmatprep.subr.mxu0 0.0
    %1096 = vmatpush1.msra.mxu0 0.0
    %1097 = vmatprep.subr.mxu0 0.0
    %1098 = vmatpush1.msra.mxu0 0.0
    %1099 = vmatprep.mubr.f32.mxu0 0.0
    %1100 = vmatmul.mubr.f32.gmra.mrb[0].mxu0 %v1033
    %v1101 = vpop.f32.mrb[0].mxu0
    %v1102 = vadd.f32 0.0, %v1101
    %v1103 = vpop.f32.mrb[0].mxu0
    %1104 = vdwg.mxu0
    %1106 = vrot.lane.b32.xlu0 %v1102, 56
    %v1107 = vpop.permute.xlu0 %1106
    %vm1109 = vcmask 583104
    %1110 = vst.msk [vmem:[%s2] sm:$0x3] %vm1109, %v1107
    %v1111 = vsub.f32 %v1102, %v909
    %v1112 = vmul.f32 %v1111, %v1111
    %vm1113 = vcmask 123904
    %v1114 = vsel %vm1113, %v1112, 0.0
    %1115 = vadd.xlane.f32.xlu0 %v1114
    %v1116 = vpop.xlane.xlu0 %1115
    %v1117 = vsel %vm743, %v1116, 0.0
    %v1118 = vrot.slane %v1117, 4
    %v1119 = vadd.f32 %v1117, %v1118
    %v1120 = vrot.slane %v1119, 2
    %v1121 = vadd.f32 %v1119, %v1120
    %v1122 = vrot.slane %v1121, 1
    %v1123 = vadd.f32 %v1121, %v1122
    %v1124 = vmul.f32 %v1123, 1.25
    %v1125 = vrcp.pop 32.0
    %v1126 = vmul.f32 %v1124, %v1125
    %v1127 = vadd.f32 %v1126, 0.0
    %vm1128 = vcmp.eq.s32.totalorder %v754, 0
    %v1129 = vsel %vm1128, %v1028, 0
    %v1130 = vld [vmem:[#allocation2 + $0x138] sm:$0xff]
    %v1131 = vld [vmem:[#allocation2 + $0x140] sm:$0x1]
    %v1132 = vlaneseq
    %v1133 = vshrl.u32 %v1132, 7
    %v1134 = vsub.s32 0, %v1133
    %v1135 = vrot.slane %v1131, %v1134
    %1136 = vmatprep.subr.mxu0 0.0
    %1137 = vmatpush1.msra.mxu0 %v1130
    %1138 = vmatprep.subr.mxu0 0.0
    %1139 = vmatpush1.msra.mxu0 0.0
    %1140 = vmatprep.subr.mxu0 0.0
    %1141 = vmatpush1.msra.mxu0 0.0
    %1142 = vmatprep.subr.mxu0 0.0
    %1143 = vmatpush1.msra.mxu0 0.0
    %1144 = vmatprep.subr.mxu0 0.0
    %1145 = vmatpush1.msra.mxu0 0.0
    %1146 = vmatprep.subr.mxu0 0.0
    %1147 = vmatpush1.msra.mxu0 0.0
    %1148 = vmatprep.subr.mxu0 0.0
    %1149 = vmatpush1.msra.mxu0 0.0
    %1150 = vmatprep.subr.mxu0 0.0
    %1151 = vmatpush1.msra.mxu0 0.0
    %1152 = vmatprep.subr.mxu0 0.0
    %1153 = vmatpush1.msra.mxu0 0.0
    %1154 = vmatprep.subr.mxu0 0.0
    %1155 = vmatpush1.msra.mxu0 0.0
    %1156 = vmatprep.subr.mxu0 0.0
    %1157 = vmatpush1.msra.mxu0 0.0
    %1158 = vmatprep.subr.mxu0 0.0
    %1159 = vmatpush1.msra.mxu0 0.0
    %1160 = vmatprep.subr.mxu0 0.0
    %1161 = vmatpush1.msra.mxu0 0.0
    %1162 = vmatprep.subr.mxu0 0.0
    %1163 = vmatpush1.msra.mxu0 0.0
    %1164 = vmatprep.subr.mxu0 0.0
    %1165 = vmatpush1.msra.mxu0 0.0
    %1166 = vmatprep.subr.mxu0 0.0
    %1167 = vmatpush1.msra.mxu0 0.0
    %1168 = vmatprep.subr.mxu0 0.0
    %1169 = vmatpush1.msra.mxu0 0.0
    %1170 = vmatprep.subr.mxu0 0.0
    %1171 = vmatpush1.msra.mxu0 0.0
    %1172 = vmatprep.subr.mxu0 0.0
    %1173 = vmatpush1.msra.mxu0 0.0
    %1174 = vmatprep.subr.mxu0 0.0
    %1175 = vmatpush1.msra.mxu0 0.0
    %1176 = vmatprep.subr.mxu0 0.0
    %1177 = vmatpush1.msra.mxu0 0.0
    %1178 = vmatprep.subr.mxu0 0.0
    %1179 = vmatpush1.msra.mxu0 0.0
    %1180 = vmatprep.subr.mxu0 0.0
    %1181 = vmatpush1.msra.mxu0 0.0
    %1182 = vmatprep.subr.mxu0 0.0
    %1183 = vmatpush1.msra.mxu0 0.0
    %1184 = vmatprep.subr.mxu0 0.0
    %1185 = vmatpush1.msra.mxu0 0.0
    %1186 = vmatprep.subr.mxu0 0.0
    %1187 = vmatpush1.msra.mxu0 0.0
    %1188 = vmatprep.subr.mxu0 0.0
    %1189 = vmatpush1.msra.mxu0 0.0
    %1190 = vmatprep.subr.mxu0 0.0
    %1191 = vmatpush1.msra.mxu0 0.0
    %1192 = vmatprep.subr.mxu0 0.0
    %1193 = vmatpush1.msra.mxu0 0.0
    %1194 = vmatprep.subr.mxu0 0.0
    %1195 = vmatpush1.msra.mxu0 0.0
    %1196 = vmatprep.subr.mxu0 0.0
    %1197 = vmatpush1.msra.mxu0 0.0
    %1198 = vmatprep.subr.mxu0 0.0
    %1199 = vmatpush1.msra.mxu0 0.0
    %1200 = vmatprep.mubr.f32.mxu0 0.0
    %1201 = vmatmul.mubr.f32.gmra.mrb[0].mxu0 %v536
    %v1202 = vpop.f32.mrb[0].mxu0
    %v1203 = vadd.f32 %v1135, %v1202
    %v1204 = vpop.f32.mrb[0].mxu0
    %1205 = vdwg.mxu0
    %v1206 = vmax.f32 %v1203, 0.0
    %v1207 = vld [vmem:[#allocation2 + $0x148] sm:$0xf]
    %v1208 = vld [vmem:[#allocation2 + $0x150] sm:$0x1]
    %v1209 = vlaneseq
    %v1210 = vshrl.u32 %v1209, 7
    %v1211 = vsub.s32 0, %v1210
    %v1212 = vrot.slane %v1208, %v1211
    %vm1213 = vcmask 31744
    %v1215 = vsel %vm1213, %v1206, 0
    %vm1217 = vcmask 1043456
    %v1219 = vsel %vm1217, %v1207, 0
    %1221 = vmatprep.subr.mxu0 0.0
    %1222 = vmatpush1.msra.mxu0 %v1219
    %1223 = vmatprep.subr.mxu0 0.0
    %1224 = vmatpush1.msra.mxu0 0.0
    %1225 = vmatprep.subr.mxu0 0.0
    %1226 = vmatpush1.msra.mxu0 0.0
    %1227 = vmatprep.subr.mxu0 0.0
    %1228 = vmatpush1.msra.mxu0 0.0
    %1229 = vmatprep.subr.mxu0 0.0
    %1230 = vmatpush1.msra.mxu0 0.0
    %1231 = vmatprep.subr.mxu0 0.0
    %1232 = vmatpush1.msra.mxu0 0.0
    %1233 = vmatprep.subr.mxu0 0.0
    %1234 = vmatpush1.msra.mxu0 0.0
    %1235 = vmatprep.subr.mxu0 0.0
    %1236 = vmatpush1.msra.mxu0 0.0
    %1237 = vmatprep.subr.mxu0 0.0
    %1238 = vmatpush1.msra.mxu0 0.0
    %1239 = vmatprep.subr.mxu0 0.0
    %1240 = vmatpush1.msra.mxu0 0.0
    %1241 = vmatprep.subr.mxu0 0.0
    %1242 = vmatpush1.msra.mxu0 0.0
    %1243 = vmatprep.subr.mxu0 0.0
    %1244 = vmatpush1.msra.mxu0 0.0
    %1245 = vmatprep.subr.mxu0 0.0
    %1246 = vmatpush1.msra.mxu0 0.0
    %1247 = vmatprep.subr.mxu0 0.0
    %1248 = vmatpush1.msra.mxu0 0.0
    %1249 = vmatprep.subr.mxu0 0.0
    %1250 = vmatpush1.msra.mxu0 0.0
    %1251 = vmatprep.subr.mxu0 0.0
    %1252 = vmatpush1.msra.mxu0 0.0
    %1253 = vmatprep.subr.mxu0 0.0
    %1254 = vmatpush1.msra.mxu0 0.0
    %1255 = vmatprep.subr.mxu0 0.0
    %1256 = vmatpush1.msra.mxu0 0.0
    %1257 = vmatprep.subr.mxu0 0.0
    %1258 = vmatpush1.msra.mxu0 0.0
    %1259 = vmatprep.subr.mxu0 0.0
    %1260 = vmatpush1.msra.mxu0 0.0
    %1261 = vmatprep.subr.mxu0 0.0
    %1262 = vmatpush1.msra.mxu0 0.0
    %1263 = vmatprep.subr.mxu0 0.0
    %1264 = vmatpush1.msra.mxu0 0.0
    %1265 = vmatprep.subr.mxu0 0.0
    %1266 = vmatpush1.msra.mxu0 0.0
    %1267 = vmatprep.subr.mxu0 0.0
    %1268 = vmatpush1.msra.mxu0 0.0
    %1269 = vmatprep.subr.mxu0 0.0
    %1270 = vmatpush1.msra.mxu0 0.0
    %1271 = vmatprep.subr.mxu0 0.0
    %1272 = vmatpush1.msra.mxu0 0.0
    %1273 = vmatprep.subr.mxu0 0.0
    %1274 = vmatpush1.msra.mxu0 0.0
    %1275 = vmatprep.subr.mxu0 0.0
    %1276 = vmatpush1.msra.mxu0 0.0
    %1277 = vmatprep.subr.mxu0 0.0
    %1278 = vmatpush1.msra.mxu0 0.0
    %1279 = vmatprep.subr.mxu0 0.0
    %1280 = vmatpush1.msra.mxu0 0.0
    %1281 = vmatprep.subr.mxu0 0.0
    %1282 = vmatpush1.msra.mxu0 0.0
    %1283 = vmatprep.subr.mxu0 0.0
    %1284 = vmatpush1.msra.mxu0 0.0
    %1285 = vmatprep.mubr.f32.mxu0 0.0
    %1286 = vmatmul.mubr.f32.gmra.mrb[0].mxu0 %v1215
    %v1287 = vpop.f32.mrb[0].mxu0
    %v1288 = vadd.f32 %v1212, %v1287
    %v1289 = vpop.f32.mrb[0].mxu0
    %1290 = vdwg.mxu0
    %v1291 = vld [vmem:[#allocation2 + $0x180] sm:$0xff]
    %v1292 = vld [vmem:[#allocation2 + $0x188] sm:$0xff]
    %v1293 = vld [vmem:[#allocation2 + $0x190] sm:$0x1]
    %v1295 = vsel %vm535, %v1288, 0
    %v1298 = vsel %vm535, %v1291, 0
    %v1301 = vsel %vm535, %v1292, 0
    %1303 = vmatprep.subr.mxu0 0.0
    %1304 = vmatpush1.xpose.msra.mxu0 %v1298
    %1305 = vmatprep.subr.mxu0 0.0
    %1306 = vmatpush1.xpose.msra.mxu0 %v1301
    %1307 = vmatprep.subr.mxu0 0.0
    %1308 = vmatpush1.xpose.msra.mxu0 0.0
    %1309 = vmatprep.subr.mxu0 0.0
    %1310 = vmatpush1.xpose.msra.mxu0 0.0
    %1311 = vmatprep.subr.mxu0 0.0
    %1312 = vmatpush1.xpose.msra.mxu0 0.0
    %1313 = vmatprep.subr.mxu0 0.0
    %1314 = vmatpush1.xpose.msra.mxu0 0.0
    %1315 = vmatprep.subr.mxu0 0.0
    %1316 = vmatpush1.xpose.msra.mxu0 0.0
    %1317 = vmatprep.subr.mxu0 0.0
    %1318 = vmatpush1.xpose.msra.mxu0 0.0
    %1319 = vmatprep.subr.mxu0 0.0
    %1320 = vmatpush1.xpose.msra.mxu0 0.0
    %1321 = vmatprep.subr.mxu0 0.0
    %1322 = vmatpush1.xpose.msra.mxu0 0.0
    %1323 = vmatprep.subr.mxu0 0.0
    %1324 = vmatpush1.xpose.msra.mxu0 0.0
    %1325 = vmatprep.subr.mxu0 0.0
    %1326 = vmatpush1.xpose.msra.mxu0 0.0
    %1327 = vmatprep.subr.mxu0 0.0
    %1328 = vmatpush1.xpose.msra.mxu0 0.0
    %1329 = vmatprep.subr.mxu0 0.0
    %1330 = vmatpush1.xpose.msra.mxu0 0.0
    %1331 = vmatprep.subr.mxu0 0.0
    %1332 = vmatpush1.xpose.msra.mxu0 0.0
    %1333 = vmatprep.subr.mxu0 0.0
    %1334 = vmatpush1.xpose.msra.mxu0 0.0
    %1335 = vmatprep.subr.mxu0 0.0
    %1336 = vmatpush1.xpose.msra.mxu0 0.0
    %1337 = vmatprep.subr.mxu0 0.0
    %1338 = vmatpush1.xpose.msra.mxu0 0.0
    %1339 = vmatprep.subr.mxu0 0.0
    %1340 = vmatpush1.xpose.msra.mxu0 0.0
    %1341 = vmatprep.subr.mxu0 0.0
    %1342 = vmatpush1.xpose.msra.mxu0 0.0
    %1343 = vmatprep.subr.mxu0 0.0
    %1344 = vmatpush1.xpose.msra.mxu0 0.0
    %1345 = vmatprep.subr.mxu0 0.0
    %1346 = vmatpush1.xpose.msra.mxu0 0.0
    %1347 = vmatprep.subr.mxu0 0.0
    %1348 = vmatpush1.xpose.msra.mxu0 0.0
    %1349 = vmatprep.subr.mxu0 0.0
    %1350 = vmatpush1.xpose.msra.mxu0 0.0
    %1351 = vmatprep.subr.mxu0 0.0
    %1352 = vmatpush1.xpose.msra.mxu0 0.0
    %1353 = vmatprep.subr.mxu0 0.0
    %1354 = vmatpush1.xpose.msra.mxu0 0.0
    %1355 = vmatprep.subr.mxu0 0.0
    %1356 = vmatpush1.xpose.msra.mxu0 0.0
    %1357 = vmatprep.subr.mxu0 0.0
    %1358 = vmatpush1.xpose.msra.mxu0 0.0
    %1359 = vmatprep.subr.mxu0 0.0
    %1360 = vmatpush1.xpose.msra.mxu0 0.0
    %1361 = vmatprep.subr.mxu0 0.0
    %1362 = vmatpush1.xpose.msra.mxu0 0.0
    %1363 = vmatprep.subr.mxu0 0.0
    %1364 = vmatpush1.xpose.msra.mxu0 0.0
    %1365 = vmatprep.subr.mxu0 0.0
    %1366 = vmatpush1.xpose.msra.mxu0 0.0
    %1367 = vmatprep.mubr.f32.mxu0 0.0
    %1368 = vmatmul.mubr.f32.gmra.mrb[0].mxu0 %v1295
    %v1369 = vpop.f32.mrb[0].mxu0
    %v1370 = vadd.f32 0.0, %v1369
    %v1371 = vpop.f32.mrb[0].mxu0
    %1372 = vdwg.mxu0
    %v1373 = vmul.f32 %v1370, 2.0
    %v1374 = vlaneseq
    %v1375 = vshrl.u32 %v1374, 7
    %v1376 = vsub.s32 0, %v1375
    %v1377 = vrot.slane %v1293, %v1376
    %v1378 = vsub.f32 %v1377, %v1373
    %v1379 = vsel %vm1113, %v1378, inf
    %1380 = vmin.xlane.f32.xlu0 %v1379
    %v1381 = vpop.xlane.xlu0 %1380
    %vm1382 = vcmp.eq.f32.partialorder %v1378, %v1381
    %v1383 = vsel %vm1382, %v754, 16
    %v1384 = vsel %vm1113, %v1383, 2147483647
    %v1385 = vand.u32 %v1384, 65535
    %v1386 = vshra.s32 %v1384, 16
    %v1387 = vcvt.s32.f32 %v1385
    %v1388 = vcvt.s32.f32 %v1386
    %1389 = vmin.xlane.f32.xlu0 %v1388
    %v1390 = vpop.xlane.xlu0 %1389
    %vm1391 = vcmp.eq.f32.partialorder %v1388, %v1390
    %v1392 = vsel %vm1391, %v1387, inf
    %1393 = vmin.xlane.f32.xlu0 %v1392
    %v1394 = vpop.xlane.xlu0 %1393
    %v1395 = vcvt.f32.s32 %v1394
    %v1396 = vcvt.f32.s32 %v1390
    %v1397 = vshll.u32 %v1396, 16
    %v1398 = vadd.s32 %v1397, %v1395
    %vm1399 = vcmp.eq.s32.totalorder %v754, %v1398
    %v1400 = vsel %vm1399, 1, 0
    %v1401 = vcvt.s32.f32 %v1400
    %v1403 = vsel %vm379, %v1401, 0
    %1405 = vmatprep.subr.mxu0 0.0
    %1406 = vmatpush1.msra.mxu0 %v1291
    %1407 = vmatprep.subr.mxu0 0.0
    %1408 = vmatpush1.msra.mxu0 %v1292
    %1409 = vmatprep.subr.mxu0 0.0
    %1410 = vmatpush1.msra.mxu0 0.0
    %1411 = vmatprep.subr.mxu0 0.0
    %1412 = vmatpush1.msra.mxu0 0.0
    %1413 = vmatprep.subr.mxu0 0.0
    %1414 = vmatpush1.msra.mxu0 0.0
    %1415 = vmatprep.subr.mxu0 0.0
    %1416 = vmatpush1.msra.mxu0 0.0
    %1417 = vmatprep.subr.mxu0 0.0
    %1418 = vmatpush1.msra.mxu0 0.0
    %1419 = vmatprep.subr.mxu0 0.0
    %1420 = vmatpush1.msra.mxu0 0.0
    %1421 = vmatprep.subr.mxu0 0.0
    %1422 = vmatpush1.msra.mxu0 0.0
    %1423 = vmatprep.subr.mxu0 0.0
    %1424 = vmatpush1.msra.mxu0 0.0
    %1425 = vmatprep.subr.mxu0 0.0
    %1426 = vmatpush1.msra.mxu0 0.0
    %1427 = vmatprep.subr.mxu0 0.0
    %1428 = vmatpush1.msra.mxu0 0.0
    %1429 = vmatprep.subr.mxu0 0.0
    %1430 = vmatpush1.msra.mxu0 0.0
    %1431 = vmatprep.subr.mxu0 0.0
    %1432 = vmatpush1.msra.mxu0 0.0
    %1433 = vmatprep.subr.mxu0 0.0
    %1434 = vmatpush1.msra.mxu0 0.0
    %1435 = vmatprep.subr.mxu0 0.0
    %1436 = vmatpush1.msra.mxu0 0.0
    %1437 = vmatprep.subr.mxu0 0.0
    %1438 = vmatpush1.msra.mxu0 0.0
    %1439 = vmatprep.subr.mxu0 0.0
    %1440 = vmatpush1.msra.mxu0 0.0
    %1441 = vmatprep.subr.mxu0 0.0
    %1442 = vmatpush1.msra.mxu0 0.0
    %1443 = vmatprep.subr.mxu0 0.0
    %1444 = vmatpush1.msra.mxu0 0.0
    %1445 = vmatprep.subr.mxu0 0.0
    %1446 = vmatpush1.msra.mxu0 0.0
    %1447 = vmatprep.subr.mxu0 0.0
    %1448 = vmatpush1.msra.mxu0 0.0
    %1449 = vmatprep.subr.mxu0 0.0
    %1450 = vmatpush1.msra.mxu0 0.0
    %1451 = vmatprep.subr.mxu0 0.0
    %1452 = vmatpush1.msra.mxu0 0.0
    %1453 = vmatprep.subr.mxu0 0.0
    %1454 = vmatpush1.msra.mxu0 0.0
    %1455 = vmatprep.subr.mxu0 0.0
    %1456 = vmatpush1.msra.mxu0 0.0
    %1457 = vmatprep.subr.mxu0 0.0
    %1458 = vmatpush1.msra.mxu0 0.0
    %1459 = vmatprep.subr.mxu0 0.0
    %1460 = vmatpush1.msra.mxu0 0.0
    %1461 = vmatprep.subr.mxu0 0.0
    %1462 = vmatpush1.msra.mxu0 0.0
    %1463 = vmatprep.subr.mxu0 0.0
    %1464 = vmatpush1.msra.mxu0 0.0
    %1465 = vmatprep.subr.mxu0 0.0
    %1466 = vmatpush1.msra.mxu0 0.0
    %1467 = vmatprep.subr.mxu0 0.0
    %1468 = vmatpush1.msra.mxu0 0.0
    %1469 = vmatprep.mubr.f32.mxu0 0.0
    %1470 = vmatmul.mubr.f32.gmra.mrb[0].mxu0 %v1403
    %v1471 = vpop.f32.mrb[0].mxu0
    %v1472 = vadd.f32 0.0, %v1471
    %v1473 = vpop.f32.mrb[0].mxu0
    %1474 = vdwg.mxu0
    %1476 = vrot.lane.b32.xlu0 %v1472, 72
    %v1477 = vpop.permute.xlu0 %1476
    %vm1479 = vcmask 648768
    %1480 = vst.msk [vmem:[%s2] sm:$0x3] %vm1479, %v1477
    %v1481 = vsub.f32 %v1472, %v1288
    %v1482 = vmul.f32 %v1481, %v1481
    %v1483 = vsel %vm738, %v1482, 0.0
    %1484 = vadd.xlane.f32.xlu0 %v1483
    %v1485 = vpop.xlane.xlu0 %1484
    %v1486 = vsel %vm743, %v1485, 0.0
    %v1487 = vrot.slane %v1486, 4
    %v1488 = vadd.f32 %v1486, %v1487
    %v1489 = vrot.slane %v1488, 2
    %v1490 = vadd.f32 %v1488, %v1489
    %v1491 = vrot.slane %v1490, 1
    %v1492 = vadd.f32 %v1490, %v1491
    %v1493 = vmul.f32 %v1492, 1.25
    %v1494 = vrcp.pop 16.0
    %v1495 = vmul.f32 %v1493, %v1494
    %v1496 = vadd.f32 %v1127, %v1495
    %vm1497 = vcmp.eq.s32.totalorder %v754, 1
    %v1498 = vsel %vm1497, %v1398, 0
    %v1499 = vadd.s32 %v1129, %v1498
    %1500 = vst [vmem:[%s3] sm:$0x3] %v1499
    %v1501 = vld [vmem:[#allocation2 + $0x1b0] sm:$0x1]
    %v1502 = vld [vmem:[#allocation2 + $0x198] sm:$0xff]
    %v1503 = vld [vmem:[#allocation2 + $0x1a0] sm:$0xff]
    %v1504 = vsel %vm379, %v1102, 0
    %1506 = vmatprep.subr.mxu0 0.0
    %1507 = vmatpush1.msra.mxu0 %v1502
    %1508 = vmatprep.subr.mxu0 0.0
    %1509 = vmatpush1.msra.mxu0 %v1503
    %1510 = vmatprep.subr.mxu0 0.0
    %1511 = vmatpush1.msra.mxu0 0.0
    %1512 = vmatprep.subr.mxu0 0.0
    %1513 = vmatpush1.msra.mxu0 0.0
    %1514 = vmatprep.subr.mxu0 0.0
    %1515 = vmatpush1.msra.mxu0 0.0
    %1516 = vmatprep.subr.mxu0 0.0
    %1517 = vmatpush1.msra.mxu0 0.0
    %1518 = vmatprep.subr.mxu0 0.0
    %1519 = vmatpush1.msra.mxu0 0.0
    %1520 = vmatprep.subr.mxu0 0.0
    %1521 = vmatpush1.msra.mxu0 0.0
    %1522 = vmatprep.subr.mxu0 0.0
    %1523 = vmatpush1.msra.mxu0 0.0
    %1524 = vmatprep.subr.mxu0 0.0
    %1525 = vmatpush1.msra.mxu0 0.0
    %1526 = vmatprep.subr.mxu0 0.0
    %1527 = vmatpush1.msra.mxu0 0.0
    %1528 = vmatprep.subr.mxu0 0.0
    %1529 = vmatpush1.msra.mxu0 0.0
    %1530 = vmatprep.subr.mxu0 0.0
    %1531 = vmatpush1.msra.mxu0 0.0
    %1532 = vmatprep.subr.mxu0 0.0
    %1533 = vmatpush1.msra.mxu0 0.0
    %1534 = vmatprep.subr.mxu0 0.0
    %1535 = vmatpush1.msra.mxu0 0.0
    %1536 = vmatprep.subr.mxu0 0.0
    %1537 = vmatpush1.msra.mxu0 0.0
    %1538 = vmatprep.subr.mxu0 0.0
    %1539 = vmatpush1.msra.mxu0 0.0
    %1540 = vmatprep.subr.mxu0 0.0
    %1541 = vmatpush1.msra.mxu0 0.0
    %1542 = vmatprep.subr.mxu0 0.0
    %1543 = vmatpush1.msra.mxu0 0.0
    %1544 = vmatprep.subr.mxu0 0.0
    %1545 = vmatpush1.msra.mxu0 0.0
    %1546 = vmatprep.subr.mxu0 0.0
    %1547 = vmatpush1.msra.mxu0 0.0
    %1548 = vmatprep.subr.mxu0 0.0
    %1549 = vmatpush1.msra.mxu0 0.0
    %1550 = vmatprep.subr.mxu0 0.0
    %1551 = vmatpush1.msra.mxu0 0.0
    %1552 = vmatprep.subr.mxu0 0.0
    %1553 = vmatpush1.msra.mxu0 0.0
    %1554 = vmatprep.subr.mxu0 0.0
    %1555 = vmatpush1.msra.mxu0 0.0
    %1556 = vmatprep.subr.mxu0 0.0
    %1557 = vmatpush1.msra.mxu0 0.0
    %1558 = vmatprep.subr.mxu0 0.0
    %1559 = vmatpush1.msra.mxu0 0.0
    %1560 = vmatprep.subr.mxu0 0.0
    %1561 = vmatpush1.msra.mxu0 0.0
    %1562 = vmatprep.subr.mxu0 0.0
    %1563 = vmatpush1.msra.mxu0 0.0
    %1564 = vmatprep.subr.mxu0 0.0
    %1565 = vmatpush1.msra.mxu0 0.0
    %1566 = vmatprep.subr.mxu0 0.0
    %1567 = vmatpush1.msra.mxu0 0.0
    %1568 = vmatprep.subr.mxu0 0.0
    %1569 = vmatpush1.msra.mxu0 0.0
    %1570 = vmatprep.mubr.f32.mxu0 0.0
    %1571 = vmatmul.mubr.f32.gmra.mrb[0].mxu0 %v1504
    %v1572 = vpop.f32.mrb[0].mxu0
    %v1573 = vadd.f32 0.0, %v1572
    %v1574 = vpop.f32.mrb[0].mxu0
    %1575 = vdwg.mxu0
    %v1576 = vlaneseq
    %v1577 = vshrl.u32 %v1576, 7
    %v1578 = vsub.s32 0, %v1577
    %v1579 = vrot.slane %v1501, %v1578
    %v1580 = vadd.f32 %v1579, %v1573
    %v1581 = vld [vmem:[#allocation2 + $0x1a8] sm:$0xff]
    %v1582 = vsel %vm535, %v1472, 0
    %1584 = vmatprep.subr.mxu0 0.0
    %1585 = vmatpush1.msra.mxu0 %v1581
    %1586 = vmatprep.subr.mxu0 0.0
    %1587 = vmatpush1.msra.mxu0 0.0
    %1588 = vmatprep.subr.mxu0 0.0
    %1589 = vmatpush1.msra.mxu0 0.0
    %1590 = vmatprep.subr.mxu0 0.0
    %1591 = vmatpush1.msra.mxu0 0.0
    %1592 = vmatprep.subr.mxu0 0.0
    %1593 = vmatpush1.msra.mxu0 0.0
    %1594 = vmatprep.subr.mxu0 0.0
    %1595 = vmatpush1.msra.mxu0 0.0
    %1596 = vmatprep.subr.mxu0 0.0
    %1597 = vmatpush1.msra.mxu0 0.0
    %1598 = vmatprep.subr.mxu0 0.0
    %1599 = vmatpush1.msra.mxu0 0.0
    %1600 = vmatprep.subr.mxu0 0.0
    %1601 = vmatpush1.msra.mxu0 0.0
    %1602 = vmatprep.subr.mxu0 0.0
    %1603 = vmatpush1.msra.mxu0 0.0
    %1604 = vmatprep.subr.mxu0 0.0
    %1605 = vmatpush1.msra.mxu0 0.0
    %1606 = vmatprep.subr.mxu0 0.0
    %1607 = vmatpush1.msra.mxu0 0.0
    %1608 = vmatprep.subr.mxu0 0.0
    %1609 = vmatpush1.msra.mxu0 0.0
    %1610 = vmatprep.subr.mxu0 0.0
    %1611 = vmatpush1.msra.mxu0 0.0
    %1612 = vmatprep.subr.mxu0 0.0
    %1613 = vmatpush1.msra.mxu0 0.0
    %1614 = vmatprep.subr.mxu0 0.0
    %1615 = vmatpush1.msra.mxu0 0.0
    %1616 = vmatprep.subr.mxu0 0.0
    %1617 = vmatpush1.msra.mxu0 0.0
    %1618 = vmatprep.subr.mxu0 0.0
    %1619 = vmatpush1.msra.mxu0 0.0
    %1620 = vmatprep.subr.mxu0 0.0
    %1621 = vmatpush1.msra.mxu0 0.0
    %1622 = vmatprep.subr.mxu0 0.0
    %1623 = vmatpush1.msra.mxu0 0.0
    %1624 = vmatprep.subr.mxu0 0.0
    %1625 = vmatpush1.msra.mxu0 0.0
    %1626 = vmatprep.subr.mxu0 0.0
    %1627 = vmatpush1.msra.mxu0 0.0
    %1628 = vmatprep.subr.mxu0 0.0
    %1629 = vmatpush1.msra.mxu0 0.0
    %1630 = vmatprep.subr.mxu0 0.0
    %1631 = vmatpush1.msra.mxu0 0.0
    %1632 = vmatprep.subr.mxu0 0.0
    %1633 = vmatpush1.msra.mxu0 0.0
    %1634 = vmatprep.subr.mxu0 0.0
    %1635 = vmatpush1.msra.mxu0 0.0
    %1636 = vmatprep.subr.mxu0 0.0
    %1637 = vmatpush1.msra.mxu0 0.0
    %1638 = vmatprep.subr.mxu0 0.0
    %1639 = vmatpush1.msra.mxu0 0.0
    %1640 = vmatprep.subr.mxu0 0.0
    %1641 = vmatpush1.msra.mxu0 0.0
    %1642 = vmatprep.subr.mxu0 0.0
    %1643 = vmatpush1.msra.mxu0 0.0
    %1644 = vmatprep.subr.mxu0 0.0
    %1645 = vmatpush1.msra.mxu0 0.0
    %1646 = vmatprep.subr.mxu0 0.0
    %1647 = vmatpush1.msra.mxu0 0.0
    %1648 = vmatprep.mubr.f32.mxu0 0.0
    %1649 = vmatmul.mubr.f32.gmra.mrb[0].mxu0 %v1582
    %v1650 = vpop.f32.mrb[0].mxu0
    %v1651 = vadd.f32 0.0, %v1650
    %v1652 = vpop.f32.mrb[0].mxu0
    %1653 = vdwg.mxu0
    %v1654 = vadd.f32 %v1580, %v1651
    %v1655 = vmax.f32 %v1654, 0.0
    %v1656 = vld [vmem:[#allocation2 + $0x1b8] sm:$0xff]
    %v1657 = vld [vmem:[#allocation2 + $0x1c0] sm:$0xff]
    %v1658 = vld [vmem:[#allocation2 + $0x1c8] sm:$0xff]
    %v1659 = vld [vmem:[#allocation2 + $0x1d0] sm:$0xff]
    %v1660 = vld [vmem:[#allocation2 + $0x1d8] sm:$0x1]
    %v1661 = vlaneseq
    %v1662 = vshrl.u32 %v1661, 7
    %v1663 = vsub.s32 0, %v1662
    %v1664 = vrot.slane %v1660, %v1663
    %v1666 = vsel %vm39, %v1655, 0
    %1668 = vmatprep.subr.mxu0 0.0
    %1669 = vmatpush1.msra.mxu0 %v1656
    %1670 = vmatprep.subr.mxu0 0.0
    %1671 = vmatpush1.msra.mxu0 %v1657
    %1672 = vmatprep.subr.mxu0 0.0
    %1673 = vmatpush1.msra.mxu0 %v1658
    %1674 = vmatprep.subr.mxu0 0.0
    %1675 = vmatpush1.msra.mxu0 %v1659
    %1676 = vmatprep.subr.mxu0 0.0
    %1677 = vmatpush1.msra.mxu0 0.0
    %1678 = vmatprep.subr.mxu0 0.0
    %1679 = vmatpush1.msra.mxu0 0.0
    %1680 = vmatprep.subr.mxu0 0.0
    %1681 = vmatpush1.msra.mxu0 0.0
    %1682 = vmatprep.subr.mxu0 0.0
    %1683 = vmatpush1.msra.mxu0 0.0
    %1684 = vmatprep.subr.mxu0 0.0
    %1685 = vmatpush1.msra.mxu0 0.0
    %1686 = vmatprep.subr.mxu0 0.0
    %1687 = vmatpush1.msra.mxu0 0.0
    %1688 = vmatprep.subr.mxu0 0.0
    %1689 = vmatpush1.msra.mxu0 0.0
    %1690 = vmatprep.subr.mxu0 0.0
    %1691 = vmatpush1.msra.mxu0 0.0
    %1692 = vmatprep.subr.mxu0 0.0
    %1693 = vmatpush1.msra.mxu0 0.0
    %1694 = vmatprep.subr.mxu0 0.0
    %1695 = vmatpush1.msra.mxu0 0.0
    %1696 = vmatprep.subr.mxu0 0.0
    %1697 = vmatpush1.msra.mxu0 0.0
    %1698 = vmatprep.subr.mxu0 0.0
    %1699 = vmatpush1.msra.mxu0 0.0
    %1700 = vmatprep.subr.mxu0 0.0
    %1701 = vmatpush1.msra.mxu0 0.0
    %1702 = vmatprep.subr.mxu0 0.0
    %1703 = vmatpush1.msra.mxu0 0.0
    %1704 = vmatprep.subr.mxu0 0.0
    %1705 = vmatpush1.msra.mxu0 0.0
    %1706 = vmatprep.subr.mxu0 0.0
    %1707 = vmatpush1.msra.mxu0 0.0
    %1708 = vmatprep.subr.mxu0 0.0
    %1709 = vmatpush1.msra.mxu0 0.0
    %1710 = vmatprep.subr.mxu0 0.0
    %1711 = vmatpush1.msra.mxu0 0.0
    %1712 = vmatprep.subr.mxu0 0.0
    %1713 = vmatpush1.msra.mxu0 0.0
    %1714 = vmatprep.subr.mxu0 0.0
    %1715 = vmatpush1.msra.mxu0 0.0
    %1716 = vmatprep.subr.mxu0 0.0
    %1717 = vmatpush1.msra.mxu0 0.0
    %1718 = vmatprep.subr.mxu0 0.0
    %1719 = vmatpush1.msra.mxu0 0.0
    %1720 = vmatprep.subr.mxu0 0.0
    %1721 = vmatpush1.msra.mxu0 0.0
    %1722 = vmatprep.subr.mxu0 0.0
    %1723 = vmatpush1.msra.mxu0 0.0
    %1724 = vmatprep.subr.mxu0 0.0
    %1725 = vmatpush1.msra.mxu0 0.0
    %1726 = vmatprep.subr.mxu0 0.0
    %1727 = vmatpush1.msra.mxu0 0.0
    %1728 = vmatprep.subr.mxu0 0.0
    %1729 = vmatpush1.msra.mxu0 0.0
    %1730 = vmatprep.subr.mxu0 0.0
    %1731 = vmatpush1.msra.mxu0 0.0
    %1732 = vmatprep.mubr.f32.mxu0 0.0
    %1733 = vmatmul.mubr.f32.gmra.mrb[0].mxu0 %v1666
    %v1734 = vpop.f32.mrb[0].mxu0
    %v1735 = vadd.f32 %v1664, %v1734
    %v1736 = vpop.f32.mrb[0].mxu0
    %1737 = vdwg.mxu0
    %v1738 = vmax.f32 %v1735, 0.0
    %v1739 = vld [vmem:[#allocation2 + $0x1e0] sm:$0xff]
    %v1740 = vld [vmem:[#allocation2 + $0x1e8] sm:$0xff]
    %v1741 = vld [vmem:[#allocation2 + $0x1f0] sm:$0xff]
    %v1742 = vld [vmem:[#allocation2 + $0x1f8] sm:$0xff]
    %v1743 = vld [vmem:[#allocation2 + $0x200] sm:$0xff]
    %v1744 = vld [vmem:[#allocation2 + $0x208] sm:$0xff]
    %v1745 = vld [vmem:[#allocation2 + $0x210] sm:$0xff]
    %v1746 = vld [vmem:[#allocation2 + $0x218] sm:$0xff]
    %v1747 = vld [vmem:[#allocation2 + $0x220] sm:$0x1]
    %v1748 = vlaneseq
    %v1749 = vshrl.u32 %v1748, 7
    %v1750 = vsub.s32 0, %v1749
    %v1751 = vrot.slane %v1747, %v1750
    %v1753 = vsel %vm127, %v1738, 0
    %1755 = vmatprep.subr.mxu0 0.0
    %1756 = vmatpush1.msra.mxu0 %v1739
    %1757 = vmatprep.subr.mxu0 0.0
    %1758 = vmatpush1.msra.mxu0 %v1740
    %1759 = vmatprep.subr.mxu0 0.0
    %1760 = vmatpush1.msra.mxu0 %v1741
    %1761 = vmatprep.subr.mxu0 0.0
    %1762 = vmatpush1.msra.mxu0 %v1742
    %1763 = vmatprep.subr.mxu0 0.0
    %1764 = vmatpush1.msra.mxu0 %v1743
    %1765 = vmatprep.subr.mxu0 0.0
    %1766 = vmatpush1.msra.mxu0 %v1744
    %1767 = vmatprep.subr.mxu0 0.0
    %1768 = vmatpush1.msra.mxu0 %v1745
    %1769 = vmatprep.subr.mxu0 0.0
    %1770 = vmatpush1.msra.mxu0 %v1746
    %1771 = vmatprep.subr.mxu0 0.0
    %1772 = vmatpush1.msra.mxu0 0.0
    %1773 = vmatprep.subr.mxu0 0.0
    %1774 = vmatpush1.msra.mxu0 0.0
    %1775 = vmatprep.subr.mxu0 0.0
    %1776 = vmatpush1.msra.mxu0 0.0
    %1777 = vmatprep.subr.mxu0 0.0
    %1778 = vmatpush1.msra.mxu0 0.0
    %1779 = vmatprep.subr.mxu0 0.0
    %1780 = vmatpush1.msra.mxu0 0.0
    %1781 = vmatprep.subr.mxu0 0.0
    %1782 = vmatpush1.msra.mxu0 0.0
    %1783 = vmatprep.subr.mxu0 0.0
    %1784 = vmatpush1.msra.mxu0 0.0
    %1785 = vmatprep.subr.mxu0 0.0
    %1786 = vmatpush1.msra.mxu0 0.0
    %1787 = vmatprep.subr.mxu0 0.0
    %1788 = vmatpush1.msra.mxu0 0.0
    %1789 = vmatprep.subr.mxu0 0.0
    %1790 = vmatpush1.msra.mxu0 0.0
    %1791 = vmatprep.subr.mxu0 0.0
    %1792 = vmatpush1.msra.mxu0 0.0
    %1793 = vmatprep.subr.mxu0 0.0
    %1794 = vmatpush1.msra.mxu0 0.0
    %1795 = vmatprep.subr.mxu0 0.0
    %1796 = vmatpush1.msra.mxu0 0.0
    %1797 = vmatprep.subr.mxu0 0.0
    %1798 = vmatpush1.msra.mxu0 0.0
    %1799 = vmatprep.subr.mxu0 0.0
    %1800 = vmatpush1.msra.mxu0 0.0
    %1801 = vmatprep.subr.mxu0 0.0
    %1802 = vmatpush1.msra.mxu0 0.0
    %1803 = vmatprep.subr.mxu0 0.0
    %1804 = vmatpush1.msra.mxu0 0.0
    %1805 = vmatprep.subr.mxu0 0.0
    %1806 = vmatpush1.msra.mxu0 0.0
    %1807 = vmatprep.subr.mxu0 0.0
    %1808 = vmatpush1.msra.mxu0 0.0
    %1809 = vmatprep.subr.mxu0 0.0
    %1810 = vmatpush1.msra.mxu0 0.0
    %1811 = vmatprep.subr.mxu0 0.0
    %1812 = vmatpush1.msra.mxu0 0.0
    %1813 = vmatprep.subr.mxu0 0.0
    %1814 = vmatpush1.msra.mxu0 0.0
    %1815 = vmatprep.subr.mxu0 0.0
    %1816 = vmatpush1.msra.mxu0 0.0
    %1817 = vmatprep.subr.mxu0 0.0
    %1818 = vmatpush1.msra.mxu0 0.0
    %1819 = vmatprep.mubr.f32.mxu0 0.0
    %1820 = vmatmul.mubr.f32.gmra.mrb[0].mxu0 %v1753
    %v1821 = vpop.f32.mrb[0].mxu0
    %v1822 = vadd.f32 %v1751, %v1821
    %v1823 = vpop.f32.mrb[0].mxu0
    %1824 = vdwg.mxu0
    %1825 = vst.msk [vmem:[%s2] sm:$0x3] %vm1008, %v1822
    %v1826 = vsub.f32 %v1822, %v28
    %v1827 = vmul.f32 %v1826, %v1826
    %v1828 = vsel %vm1008, %v1827, 0.0
    %1829 = vadd.xlane.f32.xlu0 %v1828
    %v1830 = vpop.xlane.xlu0 %1829
    %v1831 = vsel %vm743, %v1830, 0.0
    %v1832 = vrot.slane %v1831, 4
    %v1833 = vadd.f32 %v1831, %v1832
    %v1834 = vrot.slane %v1833, 2
    %v1835 = vadd.f32 %v1833, %v1834
    %v1836 = vrot.slane %v1835, 1
    %v1837 = vadd.f32 %v1835, %v1836
    %v1838 = vrcp.pop 64.0
    %v1839 = vmul.f32 %v1837, %v1838
    %v1840 = vadd.f32 %v1839, %v1496
    %v1841 = vmul.f32 %v752, 0.1
    %v1842 = vadd.f32 %v1840, %v1841
    %v1843 = vsel %vm1128, %v1842, 0.0
    %v1844 = vsel %vm1497, %v1839, 0.0
    %v1845 = vadd.f32 %v1843, %v1844
    %vm1846 = vcmp.eq.s32.totalorder %v754, 2
    %v1847 = vsel %vm1846, %v1496, 0.0
    %v1848 = vadd.f32 %v1845, %v1847
    %vm1849 = vcmp.eq.s32.totalorder %v754, 3
    %v1850 = vsel %vm1849, %v752, 0.0
    %v1851 = vadd.f32 %v1848, %v1850
    %vm1852 = vcmp.eq.s32.totalorder %v754, 4
    %v1853 = vsel %vm1852, %v1126, 0.0
    %v1854 = vadd.f32 %v1851, %v1853
    %vm1855 = vcmp.eq.s32.totalorder %v754, 5
    %v1856 = vsel %vm1855, %v1495, 0.0
    %v1857 = vadd.f32 %v1854, %v1856
    %1858 = vst [vmem:[%s4] sm:$0x1] %v1857
    // Predicated region
    $region14: #{hqvae_forward.1} parent=1 // pred_check
      _
    $region15: #{hqvae_forward.1} parent=1 // pred_check_branch
      %1860 = sbr.rel (0) target = $region17
    $region16: #{hqvae_forward.1} parent=1 // pred_region
      _
    $region17: #{hqvae_forward.1} parent=1 // pred_fallthru
      _
    // Predicated region
    $region18: #{hqvae_forward.1} parent=1 // pred_check
      _
    $region19: #{hqvae_forward.1} parent=1 // pred_check_branch
      %1862 = sbr.rel (0) target = $region21
    $region20: #{hqvae_forward.1} parent=1 // pred_region
      _
    $region21: #{hqvae_forward.1} parent=1 // pred_fallthru
      _
    // Predicated region
    $region22: #{hqvae_forward.1} parent=1 // pred_check
      _
    $region23: #{hqvae_forward.1} parent=1 // pred_check_branch
      %1864 = sbr.rel (0) target = $region25
    $region24: #{hqvae_forward.1} parent=1 // pred_region
      _
    $region25: #{hqvae_forward.1} parent=1 // pred_fallthru
      _
    // Predicated region
    $region26: #{hqvae_forward.1} parent=1 // pred_check
      _
    $region27: #{hqvae_forward.1} parent=1 // pred_check_branch
      %1866 = sbr.rel (0) target = $region29
    $region28: #{hqvae_forward.1} parent=1 // pred_region
      _
    $region29: #{hqvae_forward.1} parent=1 // pred_fallthru
      _
    // Predicated region
    $region30: #{hqvae_forward.1} parent=1 // pred_check
      _
    $region31: #{hqvae_forward.1} parent=1 // pred_check_branch
      %1868 = sbr.rel (0) target = $region33
    $region32: #{hqvae_forward.1} parent=1 // pred_region
      _
    $region33: #{hqvae_forward.1} parent=1 // pred_fallthru
      _
    // Predicated region
    $region34: #{hqvae_forward.1} parent=1 // pred_check
      _
    $region35: #{hqvae_forward.1} parent=1 // pred_check_branch
      %1870 = sbr.rel (0) target = $region37
    $region36: #{hqvae_forward.1} parent=1 // pred_region
      _
    $region37: #{hqvae_forward.1} parent=1 // pred_fallthru
      _
    %1871 = vsyncpa [#allocation3], 1

</llo_original>
